<compile_context>
chip_gen: v7x
topology: tpu7x:2x2x1
jax: 0.10.0
libtpu: 0.0.40
codegen_flags: <defaults>
</compile_context>

<pallas_src>
import functools

import jax
import jax.numpy as jnp
import numpy as np
from jax.experimental import pallas as pl
from jax.experimental.pallas import tpu as pltpu


def _shifted(a, dh, dw, H, W, C):
    """out[h, w, :] = a[h+dh, w+dw, :] if in bounds else 0.  dh, dw in {-1,0,1}."""
    if dh == -1:
        a = jnp.concatenate([jnp.zeros((1, W, C), a.dtype), a[:H - 1]], axis=0)
    elif dh == 1:
        a = jnp.concatenate([a[1:], jnp.zeros((1, W, C), a.dtype)], axis=0)
    if dw == -1:
        a = jnp.concatenate([jnp.zeros((H, 1, C), a.dtype), a[:, :W - 1]], axis=1)
    elif dw == 1:
        a = jnp.concatenate([a[:, 1:], jnp.zeros((H, 1, C), a.dtype)], axis=1)
    return a


def _residual_block_kernel(x_ref, w1_ref, b1_ref, w2_ref, b2_ref, out_ref, *,
                           H, W, C, res_scale):
    # x_ref:  (1, H, W, C)   NHWC input (unpadded)
    # w*_ref: (9*C, C)       bf16 weights, rows ordered (kh, kw, Cin)
    # b*_ref: (1, C)         f32 biases
    # out_ref:(1, H*W, C)
    HW = H * W

    def im2col(a):
        # a: (H, W, C) bf16 -> (H*W, 9*C) bf16, tap order (kh, kw) row-major,
        # matching the (kh, kw, Cin) flattening of the weight matrix.
        cols = []
        for kh in range(3):
            for kw in range(3):
                cols.append(_shifted(a, kh - 1, kw - 1, H, W, C).reshape(HW, C))
        return jnp.concatenate(cols, axis=-1)

    x = x_ref[0]                                   # (H, W, C), input dtype
    xb = x.astype(jnp.bfloat16)

    # ---- conv1 (3x3, pad 1) + bias + ReLU: one MXU matmul ----
    a1 = jax.lax.dot_general(im2col(xb), w1_ref[...],
                             (((1,), (0,)), ((), ())),
                             preferred_element_type=jnp.float32)
    a1 = jnp.maximum(a1 + b1_ref[...], 0.0)        # (HW, C) f32

    # ---- conv2 (3x3, pad 1) + bias: one MXU matmul on relu(conv1) ----
    a1b = a1.astype(jnp.bfloat16).reshape(H, W, C)
    a2 = jax.lax.dot_general(im2col(a1b), w2_ref[...],
                             (((1,), (0,)), ((), ())),
                             preferred_element_type=jnp.float32)
    a2 = a2 + b2_ref[...]                          # (HW, C) f32

    # ---- residual: identity + out * res_scale (exact f32 identity) ----
    identity = x.reshape(HW, C).astype(jnp.float32)
    out_ref[0] = (identity + a2 * res_scale).astype(out_ref.dtype)


def residual_block_no_bn(x, w1, b1, w2, b2, res_scale=1.0):
    """x: (N, C, H, W) NCHW; weights: (C, C, 3, 3) OIHW; biases: (C,)."""
    N, C, H, W = x.shape

    # NCHW -> NHWC (kept only to preserve the PyTorch interface; keep the
    # surrounding model NHWC end-to-end to drop this HBM round trip).
    x_nhwc = jnp.transpose(x, (0, 2, 3, 1))

    def prep_w(w):
        # OIHW -> (kh, kw, Cin, Cout) -> (9*Cin, Cout), bf16 for the MXU.
        return jnp.transpose(w, (2, 3, 1, 0)).reshape(9 * C, C).astype(jnp.bfloat16)

    w1k, w2k = prep_w(w1), prep_w(w2)
    b1k = b1.reshape(1, C).astype(jnp.float32)
    b2k = b2.reshape(1, C).astype(jnp.float32)

    kernel = functools.partial(_residual_block_kernel, H=H, W=W, C=C,
                               res_scale=float(res_scale))

    out = pl.pallas_call(
        kernel,
        out_shape=jax.ShapeDtypeStruct((N, H * W, C), x.dtype),
        grid_spec=pltpu.PrefetchScalarGridSpec(
            num_scalar_prefetch=0,
            grid=(N,),
            in_specs=[
                pl.BlockSpec((1, H, W, C), lambda n: (n, 0, 0, 0)),
                pl.BlockSpec((9 * C, C), lambda n: (0, 0)),
                pl.BlockSpec((1, C), lambda n: (0, 0)),
                pl.BlockSpec((9 * C, C), lambda n: (0, 0)),
                pl.BlockSpec((1, C), lambda n: (0, 0)),
            ],
            out_specs=pl.BlockSpec((1, H * W, C), lambda n: (n, 0, 0)),
        ),
        compiler_params=pltpu.CompilerParams(
            dimension_semantics=("parallel",),
            vmem_limit_bytes=64 * 1024 * 1024,
        ),
    )(x_nhwc, w1k, b1k, w2k, b2k)

    # (N, H*W, C) -> (N, H, W, C) -> NCHW
    return jnp.transpose(out.reshape(N, H, W, C), (0, 3, 1, 2))


def _reference(x, w1, b1, w2, b2, res_scale):
    """Pure-JAX NCHW reference matching the PyTorch forward."""
    dn = jax.lax.conv_dimension_numbers(x.shape, w1.shape,
                                        ("NCHW", "OIHW", "NCHW"))
    c1 = jax.lax.conv_general_dilated(
        x, w1, (1, 1), ((1, 1), (1, 1)), dimension_numbers=dn)
    c1 = c1 + b1[None, :, None, None]
    r = jnp.maximum(c1, 0.0)
    c2 = jax.lax.conv_general_dilated(
        r, w2, (1, 1), ((1, 1), (1, 1)), dimension_numbers=dn)
    c2 = c2 + b2[None, :, None, None]
    return x + c2 * res_scale


if __name__ == "__main__":
    N, C, H, W = 2, 64, 16, 16   # mid_channels=64 (module default)
    res_scale = 1.0

    key = jax.random.PRNGKey(0)
    kx, kw1, kb1, kw2, kb2 = jax.random.split(key, 5)

    x = jax.random.normal(kx, (N, C, H, W), jnp.float32)
    # Synthetic Conv2d(C, C, 3, 1, 1, bias=True) parameters.
    fan_in = C * 3 * 3
    scale = 1.0 / np.sqrt(fan_in)
    w1 = jax.random.uniform(kw1, (C, C, 3, 3), jnp.float32, -scale, scale)
    b1 = jax.random.uniform(kb1, (C,), jnp.float32, -scale, scale)
    w2 = jax.random.uniform(kw2, (C, C, 3, 3), jnp.float32, -scale, scale)
    b2 = jax.random.uniform(kb2, (C,), jnp.float32, -scale, scale)

    out = residual_block_no_bn(x, w1, b1, w2, b2, res_scale)
    out = jax.block_until_ready(out)

    ref = jax.block_until_ready(_reference(x, w1, b1, w2, b2, res_scale))
    # Tolerance loosened vs the f32 reference because the convs feed the MXU
    # in bf16 (accumulation stays f32).
    np.testing.assert_allclose(np.asarray(out), np.asarray(ref),
                               rtol=2e-2, atol=2e-2)
    print("KERNEL_OK")
</pallas_src>

<mosaic_0001>
module attributes {stable_mosaic.version = 11 : i64} {
  func.func @_residual_block_kernel(%arg0: i32, %arg1: memref<1x16x16x64xf32, #tpu.memory_space<vmem>>, %arg2: memref<576x64xbf16, #tpu.memory_space<vmem>>, %arg3: memref<1x64xf32, #tpu.memory_space<vmem>>, %arg4: memref<576x64xbf16, #tpu.memory_space<vmem>>, %arg5: memref<1x64xf32, #tpu.memory_space<vmem>>, %arg6: memref<1x256x64xf32, #tpu.memory_space<vmem>>) attributes {dimension_semantics = [#tpu.dimension_semantics<parallel>], iteration_bounds = array<i64: 2>, scalar_prefetch = 0 : i64, scratch_operands = 0 : i64, tpu.core_type = #tpu.core_type<tc>, window_params = [{transform_indices = @transform_0, window_bounds = array<i64: 1, 16, 16, 64>}, {pipeline_mode = #tpu.pipeline_mode<synchronous>, transform_indices = @transform_1, window_bounds = array<i64: 576, 64>}, {pipeline_mode = #tpu.pipeline_mode<synchronous>, transform_indices = @transform_2, window_bounds = array<i64: 1, 64>}, {pipeline_mode = #tpu.pipeline_mode<synchronous>, transform_indices = @transform_3, window_bounds = array<i64: 576, 64>}, {pipeline_mode = #tpu.pipeline_mode<synchronous>, transform_indices = @transform_4, window_bounds = array<i64: 1, 64>}, {transform_indices = @transform_5, window_bounds = array<i64: 1, 256, 64>}]} {
    %c0 = arith.constant 0 : index
    %c0_0 = arith.constant 0 : index
    %c0_1 = arith.constant 0 : index
    %c0_2 = arith.constant 0 : index
    %0 = vector.load %arg1[%c0, %c0_0, %c0_1, %c0_2] : memref<1x16x16x64xf32, #tpu.memory_space<vmem>>, vector<1x16x16x64xf32>
    %1 = vector.shape_cast %0 : vector<1x16x16x64xf32> to vector<16x16x64xf32>
    %2 = arith.truncf %1 : vector<16x16x64xf32> to vector<16x16x64xbf16>
    %cst = arith.constant 0.000000e+00 : bf16
    %3 = vector.broadcast %cst : bf16 to vector<1x16x64xbf16>
    %4 = vector.extract_strided_slice %2 {offsets = [0, 0, 0], sizes = [15, 16, 64], strides = [1, 1, 1]} : vector<16x16x64xbf16> to vector<15x16x64xbf16>
    %5 = tpu.concatenate %3, %4 in 0 : vector<1x16x64xbf16>, vector<15x16x64xbf16> -> vector<16x16x64xbf16>
    %cst_3 = arith.constant 0.000000e+00 : bf16
    %6 = vector.broadcast %cst_3 : bf16 to vector<16x1x64xbf16>
    %7 = vector.extract_strided_slice %5 {offsets = [0, 0, 0], sizes = [16, 15, 64], strides = [1, 1, 1]} : vector<16x16x64xbf16> to vector<16x15x64xbf16>
    %8 = tpu.concatenate %6, %7 in 1 : vector<16x1x64xbf16>, vector<16x15x64xbf16> -> vector<16x16x64xbf16>
    %9 = vector.shape_cast %8 : vector<16x16x64xbf16> to vector<256x64xbf16>
    %cst_4 = arith.constant 0.000000e+00 : bf16
    %10 = vector.broadcast %cst_4 : bf16 to vector<1x16x64xbf16>
    %11 = vector.extract_strided_slice %2 {offsets = [0, 0, 0], sizes = [15, 16, 64], strides = [1, 1, 1]} : vector<16x16x64xbf16> to vector<15x16x64xbf16>
    %12 = tpu.concatenate %10, %11 in 0 : vector<1x16x64xbf16>, vector<15x16x64xbf16> -> vector<16x16x64xbf16>
    %13 = vector.shape_cast %12 : vector<16x16x64xbf16> to vector<256x64xbf16>
    %cst_5 = arith.constant 0.000000e+00 : bf16
    %14 = vector.broadcast %cst_5 : bf16 to vector<1x16x64xbf16>
    %15 = vector.extract_strided_slice %2 {offsets = [0, 0, 0], sizes = [15, 16, 64], strides = [1, 1, 1]} : vector<16x16x64xbf16> to vector<15x16x64xbf16>
    %16 = tpu.concatenate %14, %15 in 0 : vector<1x16x64xbf16>, vector<15x16x64xbf16> -> vector<16x16x64xbf16>
    %17 = vector.extract_strided_slice %16 {offsets = [0, 1, 0], sizes = [16, 15, 64], strides = [1, 1, 1]} : vector<16x16x64xbf16> to vector<16x15x64xbf16>
    %cst_6 = arith.constant 0.000000e+00 : bf16
    %18 = vector.broadcast %cst_6 : bf16 to vector<16x1x64xbf16>
    %19 = tpu.concatenate %17, %18 in 1 : vector<16x15x64xbf16>, vector<16x1x64xbf16> -> vector<16x16x64xbf16>
    %20 = vector.shape_cast %19 : vector<16x16x64xbf16> to vector<256x64xbf16>
    %cst_7 = arith.constant 0.000000e+00 : bf16
    %21 = vector.broadcast %cst_7 : bf16 to vector<16x1x64xbf16>
    %22 = vector.extract_strided_slice %2 {offsets = [0, 0, 0], sizes = [16, 15, 64], strides = [1, 1, 1]} : vector<16x16x64xbf16> to vector<16x15x64xbf16>
    %23 = tpu.concatenate %21, %22 in 1 : vector<16x1x64xbf16>, vector<16x15x64xbf16> -> vector<16x16x64xbf16>
    %24 = vector.shape_cast %23 : vector<16x16x64xbf16> to vector<256x64xbf16>
    %25 = vector.shape_cast %2 : vector<16x16x64xbf16> to vector<256x64xbf16>
    %26 = vector.extract_strided_slice %2 {offsets = [0, 1, 0], sizes = [16, 15, 64], strides = [1, 1, 1]} : vector<16x16x64xbf16> to vector<16x15x64xbf16>
    %cst_8 = arith.constant 0.000000e+00 : bf16
    %27 = vector.broadcast %cst_8 : bf16 to vector<16x1x64xbf16>
    %28 = tpu.concatenate %26, %27 in 1 : vector<16x15x64xbf16>, vector<16x1x64xbf16> -> vector<16x16x64xbf16>
    %29 = vector.shape_cast %28 : vector<16x16x64xbf16> to vector<256x64xbf16>
    %30 = vector.extract_strided_slice %2 {offsets = [1, 0, 0], sizes = [15, 16, 64], strides = [1, 1, 1]} : vector<16x16x64xbf16> to vector<15x16x64xbf16>
    %cst_9 = arith.constant 0.000000e+00 : bf16
    %31 = vector.broadcast %cst_9 : bf16 to vector<1x16x64xbf16>
    %32 = tpu.concatenate %30, %31 in 0 : vector<15x16x64xbf16>, vector<1x16x64xbf16> -> vector<16x16x64xbf16>
    %cst_10 = arith.constant 0.000000e+00 : bf16
    %33 = vector.broadcast %cst_10 : bf16 to vector<16x1x64xbf16>
    %34 = vector.extract_strided_slice %32 {offsets = [0, 0, 0], sizes = [16, 15, 64], strides = [1, 1, 1]} : vector<16x16x64xbf16> to vector<16x15x64xbf16>
    %35 = tpu.concatenate %33, %34 in 1 : vector<16x1x64xbf16>, vector<16x15x64xbf16> -> vector<16x16x64xbf16>
    %36 = vector.shape_cast %35 : vector<16x16x64xbf16> to vector<256x64xbf16>
    %37 = vector.extract_strided_slice %2 {offsets = [1, 0, 0], sizes = [15, 16, 64], strides = [1, 1, 1]} : vector<16x16x64xbf16> to vector<15x16x64xbf16>
    %cst_11 = arith.constant 0.000000e+00 : bf16
    %38 = vector.broadcast %cst_11 : bf16 to vector<1x16x64xbf16>
    %39 = tpu.concatenate %37, %38 in 0 : vector<15x16x64xbf16>, vector<1x16x64xbf16> -> vector<16x16x64xbf16>
    %40 = vector.shape_cast %39 : vector<16x16x64xbf16> to vector<256x64xbf16>
    %41 = vector.extract_strided_slice %2 {offsets = [1, 0, 0], sizes = [15, 16, 64], strides = [1, 1, 1]} : vector<16x16x64xbf16> to vector<15x16x64xbf16>
    %cst_12 = arith.constant 0.000000e+00 : bf16
    %42 = vector.broadcast %cst_12 : bf16 to vector<1x16x64xbf16>
    %43 = tpu.concatenate %41, %42 in 0 : vector<15x16x64xbf16>, vector<1x16x64xbf16> -> vector<16x16x64xbf16>
    %44 = vector.extract_strided_slice %43 {offsets = [0, 1, 0], sizes = [16, 15, 64], strides = [1, 1, 1]} : vector<16x16x64xbf16> to vector<16x15x64xbf16>
    %cst_13 = arith.constant 0.000000e+00 : bf16
    %45 = vector.broadcast %cst_13 : bf16 to vector<16x1x64xbf16>
    %46 = tpu.concatenate %44, %45 in 1 : vector<16x15x64xbf16>, vector<16x1x64xbf16> -> vector<16x16x64xbf16>
    %47 = vector.shape_cast %46 : vector<16x16x64xbf16> to vector<256x64xbf16>
    %48 = tpu.concatenate %9, %13, %20, %24, %25, %29, %36, %40, %47 in 1 : vector<256x64xbf16>, vector<256x64xbf16>, vector<256x64xbf16>, vector<256x64xbf16>, vector<256x64xbf16>, vector<256x64xbf16>, vector<256x64xbf16>, vector<256x64xbf16>, vector<256x64xbf16> -> vector<256x576xbf16>
    %c0_14 = arith.constant 0 : index
    %c0_15 = arith.constant 0 : index
    %49 = vector.load %arg2[%c0_14, %c0_15] : memref<576x64xbf16, #tpu.memory_space<vmem>>, vector<576x64xbf16>
    %cst_16 = arith.constant dense<0.000000e+00> : vector<256x64xf32>
    %50 = tpu.matmul %48, %49, %cst_16 {dimension_numbers = #tpu.dot_dimension_numbers<[1], [0], [0], [1], [0, 0, 1, 1], [], []>} : vector<256x576xbf16>, vector<576x64xbf16>, vector<256x64xf32> -> vector<256x64xf32>
    %c0_17 = arith.constant 0 : index
    %c0_18 = arith.constant 0 : index
    %51 = vector.load %arg3[%c0_17, %c0_18] : memref<1x64xf32, #tpu.memory_space<vmem>>, vector<1x64xf32>
    %52 = vector.broadcast %51 : vector<1x64xf32> to vector<256x64xf32>
    %53 = arith.addf %50, %52 : vector<256x64xf32>
    %cst_19 = arith.constant 0.000000e+00 : f32
    %54 = vector.broadcast %cst_19 : f32 to vector<256x64xf32>
    %55 = arith.maximumf %53, %54 : vector<256x64xf32>
    %56 = arith.truncf %55 : vector<256x64xf32> to vector<256x64xbf16>
    %57 = vector.shape_cast %56 : vector<256x64xbf16> to vector<16x16x64xbf16>
    %cst_20 = arith.constant 0.000000e+00 : bf16
    %58 = vector.broadcast %cst_20 : bf16 to vector<1x16x64xbf16>
    %59 = vector.extract_strided_slice %57 {offsets = [0, 0, 0], sizes = [15, 16, 64], strides = [1, 1, 1]} : vector<16x16x64xbf16> to vector<15x16x64xbf16>
    %60 = tpu.concatenate %58, %59 in 0 : vector<1x16x64xbf16>, vector<15x16x64xbf16> -> vector<16x16x64xbf16>
    %cst_21 = arith.constant 0.000000e+00 : bf16
    %61 = vector.broadcast %cst_21 : bf16 to vector<16x1x64xbf16>
    %62 = vector.extract_strided_slice %60 {offsets = [0, 0, 0], sizes = [16, 15, 64], strides = [1, 1, 1]} : vector<16x16x64xbf16> to vector<16x15x64xbf16>
    %63 = tpu.concatenate %61, %62 in 1 : vector<16x1x64xbf16>, vector<16x15x64xbf16> -> vector<16x16x64xbf16>
    %64 = vector.shape_cast %63 : vector<16x16x64xbf16> to vector<256x64xbf16>
    %cst_22 = arith.constant 0.000000e+00 : bf16
    %65 = vector.broadcast %cst_22 : bf16 to vector<1x16x64xbf16>
    %66 = vector.extract_strided_slice %57 {offsets = [0, 0, 0], sizes = [15, 16, 64], strides = [1, 1, 1]} : vector<16x16x64xbf16> to vector<15x16x64xbf16>
    %67 = tpu.concatenate %65, %66 in 0 : vector<1x16x64xbf16>, vector<15x16x64xbf16> -> vector<16x16x64xbf16>
    %68 = vector.shape_cast %67 : vector<16x16x64xbf16> to vector<256x64xbf16>
    %cst_23 = arith.constant 0.000000e+00 : bf16
    %69 = vector.broadcast %cst_23 : bf16 to vector<1x16x64xbf16>
    %70 = vector.extract_strided_slice %57 {offsets = [0, 0, 0], sizes = [15, 16, 64], strides = [1, 1, 1]} : vector<16x16x64xbf16> to vector<15x16x64xbf16>
    %71 = tpu.concatenate %69, %70 in 0 : vector<1x16x64xbf16>, vector<15x16x64xbf16> -> vector<16x16x64xbf16>
    %72 = vector.extract_strided_slice %71 {offsets = [0, 1, 0], sizes = [16, 15, 64], strides = [1, 1, 1]} : vector<16x16x64xbf16> to vector<16x15x64xbf16>
    %cst_24 = arith.constant 0.000000e+00 : bf16
    %73 = vector.broadcast %cst_24 : bf16 to vector<16x1x64xbf16>
    %74 = tpu.concatenate %72, %73 in 1 : vector<16x15x64xbf16>, vector<16x1x64xbf16> -> vector<16x16x64xbf16>
    %75 = vector.shape_cast %74 : vector<16x16x64xbf16> to vector<256x64xbf16>
    %cst_25 = arith.constant 0.000000e+00 : bf16
    %76 = vector.broadcast %cst_25 : bf16 to vector<16x1x64xbf16>
    %77 = vector.extract_strided_slice %57 {offsets = [0, 0, 0], sizes = [16, 15, 64], strides = [1, 1, 1]} : vector<16x16x64xbf16> to vector<16x15x64xbf16>
    %78 = tpu.concatenate %76, %77 in 1 : vector<16x1x64xbf16>, vector<16x15x64xbf16> -> vector<16x16x64xbf16>
    %79 = vector.shape_cast %78 : vector<16x16x64xbf16> to vector<256x64xbf16>
    %80 = vector.shape_cast %57 : vector<16x16x64xbf16> to vector<256x64xbf16>
    %81 = vector.extract_strided_slice %57 {offsets = [0, 1, 0], sizes = [16, 15, 64], strides = [1, 1, 1]} : vector<16x16x64xbf16> to vector<16x15x64xbf16>
    %cst_26 = arith.constant 0.000000e+00 : bf16
    %82 = vector.broadcast %cst_26 : bf16 to vector<16x1x64xbf16>
    %83 = tpu.concatenate %81, %82 in 1 : vector<16x15x64xbf16>, vector<16x1x64xbf16> -> vector<16x16x64xbf16>
    %84 = vector.shape_cast %83 : vector<16x16x64xbf16> to vector<256x64xbf16>
    %85 = vector.extract_strided_slice %57 {offsets = [1, 0, 0], sizes = [15, 16, 64], strides = [1, 1, 1]} : vector<16x16x64xbf16> to vector<15x16x64xbf16>
    %cst_27 = arith.constant 0.000000e+00 : bf16
    %86 = vector.broadcast %cst_27 : bf16 to vector<1x16x64xbf16>
    %87 = tpu.concatenate %85, %86 in 0 : vector<15x16x64xbf16>, vector<1x16x64xbf16> -> vector<16x16x64xbf16>
    %cst_28 = arith.constant 0.000000e+00 : bf16
    %88 = vector.broadcast %cst_28 : bf16 to vector<16x1x64xbf16>
    %89 = vector.extract_strided_slice %87 {offsets = [0, 0, 0], sizes = [16, 15, 64], strides = [1, 1, 1]} : vector<16x16x64xbf16> to vector<16x15x64xbf16>
    %90 = tpu.concatenate %88, %89 in 1 : vector<16x1x64xbf16>, vector<16x15x64xbf16> -> vector<16x16x64xbf16>
    %91 = vector.shape_cast %90 : vector<16x16x64xbf16> to vector<256x64xbf16>
    %92 = vector.extract_strided_slice %57 {offsets = [1, 0, 0], sizes = [15, 16, 64], strides = [1, 1, 1]} : vector<16x16x64xbf16> to vector<15x16x64xbf16>
    %cst_29 = arith.constant 0.000000e+00 : bf16
    %93 = vector.broadcast %cst_29 : bf16 to vector<1x16x64xbf16>
    %94 = tpu.concatenate %92, %93 in 0 : vector<15x16x64xbf16>, vector<1x16x64xbf16> -> vector<16x16x64xbf16>
    %95 = vector.shape_cast %94 : vector<16x16x64xbf16> to vector<256x64xbf16>
    %96 = vector.extract_strided_slice %57 {offsets = [1, 0, 0], sizes = [15, 16, 64], strides = [1, 1, 1]} : vector<16x16x64xbf16> to vector<15x16x64xbf16>
    %cst_30 = arith.constant 0.000000e+00 : bf16
    %97 = vector.broadcast %cst_30 : bf16 to vector<1x16x64xbf16>
    %98 = tpu.concatenate %96, %97 in 0 : vector<15x16x64xbf16>, vector<1x16x64xbf16> -> vector<16x16x64xbf16>
    %99 = vector.extract_strided_slice %98 {offsets = [0, 1, 0], sizes = [16, 15, 64], strides = [1, 1, 1]} : vector<16x16x64xbf16> to vector<16x15x64xbf16>
    %cst_31 = arith.constant 0.000000e+00 : bf16
    %100 = vector.broadcast %cst_31 : bf16 to vector<16x1x64xbf16>
    %101 = tpu.concatenate %99, %100 in 1 : vector<16x15x64xbf16>, vector<16x1x64xbf16> -> vector<16x16x64xbf16>
    %102 = vector.shape_cast %101 : vector<16x16x64xbf16> to vector<256x64xbf16>
    %103 = tpu.concatenate %64, %68, %75, %79, %80, %84, %91, %95, %102 in 1 : vector<256x64xbf16>, vector<256x64xbf16>, vector<256x64xbf16>, vector<256x64xbf16>, vector<256x64xbf16>, vector<256x64xbf16>, vector<256x64xbf16>, vector<256x64xbf16>, vector<256x64xbf16> -> vector<256x576xbf16>
    %c0_32 = arith.constant 0 : index
    %c0_33 = arith.constant 0 : index
    %104 = vector.load %arg4[%c0_32, %c0_33] : memref<576x64xbf16, #tpu.memory_space<vmem>>, vector<576x64xbf16>
    %cst_34 = arith.constant dense<0.000000e+00> : vector<256x64xf32>
    %105 = tpu.matmul %103, %104, %cst_34 {dimension_numbers = #tpu.dot_dimension_numbers<[1], [0], [0], [1], [0, 0, 1, 1], [], []>} : vector<256x576xbf16>, vector<576x64xbf16>, vector<256x64xf32> -> vector<256x64xf32>
    %c0_35 = arith.constant 0 : index
    %c0_36 = arith.constant 0 : index
    %106 = vector.load %arg5[%c0_35, %c0_36] : memref<1x64xf32, #tpu.memory_space<vmem>>, vector<1x64xf32>
    %107 = vector.broadcast %106 : vector<1x64xf32> to vector<256x64xf32>
    %108 = arith.addf %105, %107 : vector<256x64xf32>
    %109 = vector.shape_cast %1 : vector<16x16x64xf32> to vector<256x64xf32>
    %cst_37 = arith.constant 1.000000e+00 : f32
    %110 = vector.broadcast %cst_37 : f32 to vector<256x64xf32>
    %111 = arith.mulf %108, %110 : vector<256x64xf32>
    %112 = arith.addf %109, %111 : vector<256x64xf32>
    %c0_38 = arith.constant 0 : index
    %c0_39 = arith.constant 0 : index
    %c0_40 = arith.constant 0 : index
    %113 = vector.load %arg6[%c0_38, %c0_39, %c0_40] : memref<1x256x64xf32, #tpu.memory_space<vmem>>, vector<1x256x64xf32>
    %114 = vector.shape_cast %113 : vector<1x256x64xf32> to vector<256x64xf32>
    %115 = vector.shape_cast %112 : vector<256x64xf32> to vector<1x256x64xf32>
    tpu.vector_store %arg6[%c0_38, %c0_39, %c0_40], %115 {strides = array<i32>} : memref<1x256x64xf32, #tpu.memory_space<vmem>>, vector<1x256x64xf32>,
    return
  }
  func.func @transform_0(%arg0: i32) -> (i32, i32, i32, i32) {
    %c0_i32 = arith.constant 0 : i32
    %c0_i32_0 = arith.constant 0 : i32
    %c0_i32_1 = arith.constant 0 : i32
    %c0_i32_2 = arith.constant 0 : i32
    return %arg0, %c0_i32, %c0_i32_0, %c0_i32_1 : i32, i32, i32, i32
  }
  func.func @transform_1(%arg0: i32) -> (i32, i32) {
    %c0_i32 = arith.constant 0 : i32
    %c0_i32_0 = arith.constant 0 : i32
    %c0_i32_1 = arith.constant 0 : i32
    return %c0_i32, %c0_i32_0 : i32, i32
  }
  func.func @transform_2(%arg0: i32) -> (i32, i32) {
    %c0_i32 = arith.constant 0 : i32
    %c0_i32_0 = arith.constant 0 : i32
    %c0_i32_1 = arith.constant 0 : i32
    return %c0_i32, %c0_i32_0 : i32, i32
  }
  func.func @transform_3(%arg0: i32) -> (i32, i32) {
    %c0_i32 = arith.constant 0 : i32
    %c0_i32_0 = arith.constant 0 : i32
    %c0_i32_1 = arith.constant 0 : i32
    return %c0_i32, %c0_i32_0 : i32, i32
  }
  func.func @transform_4(%arg0: i32) -> (i32, i32) {
    %c0_i32 = arith.constant 0 : i32
    %c0_i32_0 = arith.constant 0 : i32
    %c0_i32_1 = arith.constant 0 : i32
    return %c0_i32, %c0_i32_0 : i32, i32
  }
  func.func @transform_5(%arg0: i32) -> (i32, i32, i32) {
    %c0_i32 = arith.constant 0 : i32
    %c0_i32_0 = arith.constant 0 : i32
    %c0_i32_1 = arith.constant 0 : i32
    return %arg0, %c0_i32, %c0_i32_0 : i32, i32, i32
  }
}

</mosaic_0001>

<llo_original>
// kernel: tpu_custom_call.1
$region0: #{tpu_custom_call.1}
  #allocation0 [shape = 'u32[]', space=smem, size = 0x4, offset = 0x4, fixed_abs, tag = 'smem constant byte address 0x4 - core index']
  #allocation1 [shape = 'u32[144,128]{1,0:T(1,128)}', space=vmem, size = 0x12000, scoped, tag = 'internal scratch']
  %s0 = inlined_call_operand.hbm [shape: f32[2,16,16,64], index: 0, kind: input, shape index: {}]
  %s1 = inlined_call_operand.hbm [shape: bf16[576,64], index: 1, kind: input, shape index: {}]
  %s2 = inlined_call_operand.hbm [shape: f32[1,64], index: 2, kind: input, shape index: {}]
  %s3 = inlined_call_operand.hbm [shape: bf16[576,64], index: 3, kind: input, shape index: {}]
  %s4 = inlined_call_operand.hbm [shape: f32[1,64], index: 4, kind: input, shape index: {}]
  %s5 = inlined_call_operand.hbm [shape: f32[2,256,64], index: 5, kind: output, shape index: {}]
  %s6 = sld [smem:[#allocation0]]
  $region73: #{tpu_custom_call.1} parent=0
    _
  %s8 = ssub.s32 1, %s6
  %s9 = scalar_select 0, %s8, %s6
  $region1: #{tpu_custom_call.1} parent=0
    #allocation2 [shape = 'u8[262144]{0}', space=vmem, size = 0x40000, scoped, tag = 'input window, operand 0']
    #allocation3 [shape = 's32[2]{0}', space=sflag, size = 0x8, scoped, tag = 'scoped memory for tpu_custom_call.1']
    #allocation4 [shape = 's32[2]{0}', space=sflag, size = 0x8, scoped, tag = 'scoped memory for tpu_custom_call.1']
    #allocation5 [shape = 'u8[147456]{0}', space=vmem, size = 0x24000, scoped, tag = 'input window, operand 1, single buffered']
    #allocation6 [shape = 's32[1]{0}', space=sflag, size = 0x4, scoped, tag = 'scoped memory for tpu_custom_call.1']
    #allocation7 [shape = 'u8[512]{0}', space=vmem, size = 0x400, scoped, tag = 'input window, operand 2, single buffered']
    #allocation8 [shape = 'u8[147456]{0}', space=vmem, size = 0x24000, scoped, tag = 'input window, operand 3, single buffered']
    #allocation9 [shape = 's32[1]{0}', space=sflag, size = 0x4, scoped, tag = 'scoped memory for tpu_custom_call.1']
    #allocation10 [shape = 'u8[512]{0}', space=vmem, size = 0x400, scoped, tag = 'input window, operand 4, single buffered']
    #allocation11 [shape = 'u8[262144]{0}', space=vmem, size = 0x40000, scoped, tag = 'output window, operand 0']
    %10 = vsyncpa [#allocation3], 0
    %s11 = scalar_lea.sflag [#allocation3], 1
    %12 = vsyncpa %s11, 0
    %13 = vsyncpa [#allocation6], 0
    %14 = vsyncpa [#allocation9], 0
    %15 = vsyncpa [#allocation4], 0
    %s16 = scalar_lea.sflag [#allocation4], 1
    %17 = vsyncpa %s16, 0
    loop: start=0, step=1, limit=4
    $region2: #{tpu_custom_call.1} parent=1 // loop_pre_header
      _
    $region3: #{tpu_custom_call.1} parent=1 // loop_header
      %s19 = sphi 0, %s23
      %p20 = scmp.ge.s32.totalorder %s19, 4
      %s29 = sphi 0, %s31
      %s32 = sphi 0, %s29
      %s33 = sphi 0, %s32
      %s49 = sphi 0, %s33
      %s53 = sphi 0, %s53
      %s55 = sphi 0, %s53
      %s56 = sphi 0, %s55
      %s70 = sphi 0, %s56
      %s74 = sphi 0, %s74
      %s76 = sphi 0, %s74
      %s77 = sphi 0, %s76
      %s91 = sphi 0, %s77
      %s95 = sphi 0, %s95
      %s97 = sphi 0, %s95
      %s98 = sphi 0, %s97
      %s112 = sphi 0, %s98
      %s116 = sphi 0, %s116
      %s118 = sphi 0, %s116
      %s119 = sphi 0, %s118
      %s133 = sphi 0, %s119
      %s139 = sphi 0, %s141
      %s142 = sphi 0, %s139
      %s143 = sphi 0, %s142
      %s159 = sphi 0, %s143
    $region4: #{tpu_custom_call.1} parent=1 // loop_header_branch
      %22 = sbr.rel (%p20) target = $region8
    $region5: #{tpu_custom_call.1} parent=1 // loop_body
      %s24 = ssub.s32 %s19, 1
      %s25 = ssub.s32 %s19, 2
      %s26 = sadd.s32 %s19, 1
      %s27 = ssub.s32 %s19, %s26
      %p28 = scmp.eq.s32.totalorder %s27, 0
      %s30 = sadd.s32 %s29, 1
      %s31 = scalar_select %p28, %s29, %s30
      %p34 = pneg %p28
      %p35 = scmp.eq.s32.totalorder %s19, 1
      %p36 = por %p34, %p35
      %p37 = scmp.ne.s32.totalorder %s29, %s32
      %p38 = scmp.eq.s32.totalorder %s19, 0
      %p39 = por %p37, %p38
      %p40 = scmp.ne.s32.totalorder %s29, %s32
      %p41 = scmp.eq.s32.totalorder %s24, 1
      %p42 = por %p40, %p41
      %p43 = scmp.ne.s32.totalorder %s32, %s33
      %p44 = scmp.eq.s32.totalorder %s24, 0
      %p45 = por %p43, %p44
      %p46 = scmp.ne.s32.totalorder %s32, %s33
      %p47 = scmp.eq.s32.totalorder %s25, 1
      %p48 = por %p46, %p47
      %p50 = scmp.ne.s32.totalorder %s33, %s49
      %p51 = scmp.eq.s32.totalorder %s25, 0
      %p52 = por %p50, %p51
      %s54 = sadd.s32 %s53, 1
      %p57 = scmp.eq.s32.totalorder %s19, 1
      %p58 = scmp.ne.s32.totalorder %s53, %s55
      %p59 = scmp.eq.s32.totalorder %s19, 0
      %p60 = por %p58, %p59
      %p61 = scmp.ne.s32.totalorder %s53, %s55
      %p62 = scmp.eq.s32.totalorder %s24, 1
      %p63 = por %p61, %p62
      %p64 = scmp.ne.s32.totalorder %s55, %s56
      %p65 = scmp.eq.s32.totalorder %s24, 0
      %p66 = por %p64, %p65
      %p67 = scmp.ne.s32.totalorder %s55, %s56
      %p68 = scmp.eq.s32.totalorder %s25, 1
      %p69 = por %p67, %p68
      %p71 = scmp.ne.s32.totalorder %s56, %s70
      %p72 = scmp.eq.s32.totalorder %s25, 0
      %p73 = por %p71, %p72
      %s75 = sadd.s32 %s74, 1
      %p78 = scmp.eq.s32.totalorder %s19, 1
      %p79 = scmp.ne.s32.totalorder %s74, %s76
      %p80 = scmp.eq.s32.totalorder %s19, 0
      %p81 = por %p79, %p80
      %p82 = scmp.ne.s32.totalorder %s74, %s76
      %p83 = scmp.eq.s32.totalorder %s24, 1
      %p84 = por %p82, %p83
      %p85 = scmp.ne.s32.totalorder %s76, %s77
      %p86 = scmp.eq.s32.totalorder %s24, 0
      %p87 = por %p85, %p86
      %p88 = scmp.ne.s32.totalorder %s76, %s77
      %p89 = scmp.eq.s32.totalorder %s25, 1
      %p90 = por %p88, %p89
      %p92 = scmp.ne.s32.totalorder %s77, %s91
      %p93 = scmp.eq.s32.totalorder %s25, 0
      %p94 = por %p92, %p93
      %s96 = sadd.s32 %s95, 1
      %p99 = scmp.eq.s32.totalorder %s19, 1
      %p100 = scmp.ne.s32.totalorder %s95, %s97
      %p101 = scmp.eq.s32.totalorder %s19, 0
      %p102 = por %p100, %p101
      %p103 = scmp.ne.s32.totalorder %s95, %s97
      %p104 = scmp.eq.s32.totalorder %s24, 1
      %p105 = por %p103, %p104
      %p106 = scmp.ne.s32.totalorder %s97, %s98
      %p107 = scmp.eq.s32.totalorder %s24, 0
      %p108 = por %p106, %p107
      %p109 = scmp.ne.s32.totalorder %s97, %s98
      %p110 = scmp.eq.s32.totalorder %s25, 1
      %p111 = por %p109, %p110
      %p113 = scmp.ne.s32.totalorder %s98, %s112
      %p114 = scmp.eq.s32.totalorder %s25, 0
      %p115 = por %p113, %p114
      %s117 = sadd.s32 %s116, 1
      %p120 = scmp.eq.s32.totalorder %s19, 1
      %p121 = scmp.ne.s32.totalorder %s116, %s118
      %p122 = scmp.eq.s32.totalorder %s19, 0
      %p123 = por %p121, %p122
      %p124 = scmp.ne.s32.totalorder %s116, %s118
      %p125 = scmp.eq.s32.totalorder %s24, 1
      %p126 = por %p124, %p125
      %p127 = scmp.ne.s32.totalorder %s118, %s119
      %p128 = scmp.eq.s32.totalorder %s24, 0
      %p129 = por %p127, %p128
      %p130 = scmp.ne.s32.totalorder %s118, %s119
      %p131 = scmp.eq.s32.totalorder %s25, 1
      %p132 = por %p130, %p131
      %p134 = scmp.ne.s32.totalorder %s119, %s133
      %p135 = scmp.eq.s32.totalorder %s25, 0
      %p136 = por %p134, %p135
      %s137 = ssub.s32 %s19, %s26
      %p138 = scmp.eq.s32.totalorder %s137, 0
      %s140 = sadd.s32 %s139, 1
      %s141 = scalar_select %p138, %s139, %s140
      %p144 = pneg %p138
      %p145 = scmp.eq.s32.totalorder %s19, 1
      %p146 = por %p144, %p145
      %p147 = scmp.ne.s32.totalorder %s139, %s142
      %p148 = scmp.eq.s32.totalorder %s19, 0
      %p149 = por %p147, %p148
      %p150 = scmp.ne.s32.totalorder %s139, %s142
      %p151 = scmp.eq.s32.totalorder %s24, 1
      %p152 = por %p150, %p151
      %p153 = scmp.ne.s32.totalorder %s142, %s143
      %p154 = scmp.eq.s32.totalorder %s24, 0
      %p155 = por %p153, %p154
      %p156 = scmp.ne.s32.totalorder %s142, %s143
      %p157 = scmp.eq.s32.totalorder %s25, 1
      %p158 = por %p156, %p157
      %p160 = scmp.ne.s32.totalorder %s143, %s159
      %p161 = scmp.eq.s32.totalorder %s25, 0
      %p162 = por %p160, %p161
      %p163 = scmp.le.s32.totalorder 1, %s19
      %p164 = scmp.lt.s32.totalorder %s19, 3
      %p165 = pnand %p163, %p164
      %p166 = pneg %p165
      // Predicated region
      $region9: #{tpu_custom_call.1} parent=5 // pred_check
        _
      $region10: #{tpu_custom_call.1} parent=5 // pred_check_branch
        %168 = sbr.rel (%p165) target = $region12
      $region11: #{tpu_custom_call.1} parent=5 // pred_region
        %s169 = ssub.s32 %s19, 1
        // Predicated region
        $region13: #{tpu_custom_call.1} parent=11 // pred_check
          %p170 = pneg %p66
        $region14: #{tpu_custom_call.1} parent=11 // pred_check_branch
          %172 = sbr.rel (%p170) target = $region16
        $region15: #{tpu_custom_call.1} parent=11 // pred_region
          %s174 = ssub.s32 4608, 4608
          %175 = vsyncadd [#allocation6], %s174
          %s176 = sshll.u32 [#allocation5], 4
          %s177 = int_to_ptr.vmem [resolvable:$true] %s176
          %182 = dma.hbm_to_vmem [thread:$0]  %s1, 4608, %s177, [#allocation6], 64, 64, 4
        $region16: #{tpu_custom_call.1} parent=11 // pred_fallthru
          _
        // Predicated region
        $region17: #{tpu_custom_call.1} parent=11 // pred_check
          %p183 = pneg %p87
        $region18: #{tpu_custom_call.1} parent=11 // pred_check_branch
          %185 = sbr.rel (%p183) target = $region20
        $region19: #{tpu_custom_call.1} parent=11 // pred_region
          %s187 = ssub.s32 16, 16
          %188 = vsyncadd [#allocation6], %s187
          %s190 = sshll.u32 [#allocation7], 4
          %s191 = int_to_ptr.vmem [resolvable:$true] %s190
          %193 = dma.hbm_to_vmem [thread:$0]  %s2, 16, %s191, [#allocation6]
        $region20: #{tpu_custom_call.1} parent=11 // pred_fallthru
          _
        // Predicated region
        $region21: #{tpu_custom_call.1} parent=11 // pred_check
          %p194 = pneg %p108
        $region22: #{tpu_custom_call.1} parent=11 // pred_check_branch
          %196 = sbr.rel (%p194) target = $region24
        $region23: #{tpu_custom_call.1} parent=11 // pred_region
          %s198 = ssub.s32 4608, 4608
          %199 = vsyncadd [#allocation9], %s198
          %s200 = sshll.u32 [#allocation8], 4
          %s201 = int_to_ptr.vmem [resolvable:$true] %s200
          %206 = dma.hbm_to_vmem [thread:$0]  %s3, 4608, %s201, [#allocation9], 64, 64, 4
        $region24: #{tpu_custom_call.1} parent=11 // pred_fallthru
          _
        // Predicated region
        $region25: #{tpu_custom_call.1} parent=11 // pred_check
          %p207 = pneg %p129
        $region26: #{tpu_custom_call.1} parent=11 // pred_check_branch
          %209 = sbr.rel (%p207) target = $region28
        $region27: #{tpu_custom_call.1} parent=11 // pred_region
          %s211 = ssub.s32 16, 16
          %212 = vsyncadd [#allocation9], %s211
          %s214 = sshll.u32 [#allocation10], 4
          %s215 = int_to_ptr.vmem [resolvable:$true] %s214
          %217 = dma.hbm_to_vmem [thread:$0]  %s4, 16, %s215, [#allocation9]
        $region28: #{tpu_custom_call.1} parent=11 // pred_fallthru
          _
      $region12: #{tpu_custom_call.1} parent=5 // pred_fallthru
        _
      %p218 = scmp.lt.s32.totalorder %s19, 2
      // Predicated region
      $region29: #{tpu_custom_call.1} parent=5 // pred_check
        %p219 = pneg %p218
      $region30: #{tpu_custom_call.1} parent=5 // pred_check_branch
        %221 = sbr.rel (%p219) target = $region32
      $region31: #{tpu_custom_call.1} parent=5 // pred_region
        // Predicated region
        $region33: #{tpu_custom_call.1} parent=31 // pred_check
          %p222 = pneg %p39
        $region34: #{tpu_custom_call.1} parent=31 // pred_check_branch
          %224 = sbr.rel (%p222) target = $region36
        $region35: #{tpu_custom_call.1} parent=31 // pred_region
          %s225 = sand.u32 %s29, 1
          %s226 = scalar_lea.sflag [#allocation3], %s225
          %s227 = sand.u32 %s29, 1
          %s228 = smul.addr %s227, 256
          %s229 = scalar_lea.vmem [#allocation2], %s228
          %s231 = ssub.s32 4096, 4096
          %232 = vsyncadd %s226, %s231
          %s233 = smul.addr %s19, 32
          %s234 = smul.addr %s233, 128
          %s235 = scalar_lea.hbm %s0, %s234
          %s236 = sshll.u32 %s229, 4
          %s237 = int_to_ptr.vmem [resolvable:$true] %s236
          %242 = dma.hbm_to_vmem [thread:$0]  %s235, 4096, %s237, %s226, 128, 128, 8
        $region36: #{tpu_custom_call.1} parent=31 // pred_fallthru
          _
      $region32: #{tpu_custom_call.1} parent=5 // pred_fallthru
        _
      %p243 = scmp.le.s32.totalorder 1, %s19
      %p244 = scmp.lt.s32.totalorder %s19, 3
      %p245 = pnand %p243, %p244
      %p246 = pneg %p245
      // Predicated region
      $region37: #{tpu_custom_call.1} parent=5 // pred_check
        _
      $region38: #{tpu_custom_call.1} parent=5 // pred_check_branch
        %248 = sbr.rel (%p245) target = $region40
      $region39: #{tpu_custom_call.1} parent=5 // pred_region
        %s249 = ssub.s32 %s19, 1
        %s250 = sand.u32 %s32, 1
        %s251 = scalar_lea.sflag [#allocation3], %s250
        %s252 = sand.u32 %s32, 1
        %s253 = smul.addr %s252, 256
        %s254 = scalar_lea.vmem [#allocation2], %s253
        // Predicated region
        $region41: #{tpu_custom_call.1} parent=39 // pred_check
          %p255 = pneg %p45
        $region42: #{tpu_custom_call.1} parent=39 // pred_check_branch
          %257 = sbr.rel (%p255) target = $region44
        $region43: #{tpu_custom_call.1} parent=39 // pred_region
          %258 = dma.done %s251, 4096
        $region44: #{tpu_custom_call.1} parent=39 // pred_fallthru
          _
        // Predicated region
        $region45: #{tpu_custom_call.1} parent=39 // pred_check
          %p259 = pneg %p66
        $region46: #{tpu_custom_call.1} parent=39 // pred_check_branch
          %261 = sbr.rel (%p259) target = $region48
        $region47: #{tpu_custom_call.1} parent=39 // pred_region
          %262 = dma.done [#allocation6], 4608
        $region48: #{tpu_custom_call.1} parent=39 // pred_fallthru
          _
        // Predicated region
        $region49: #{tpu_custom_call.1} parent=39 // pred_check
          %p263 = pneg %p87
        $region50: #{tpu_custom_call.1} parent=39 // pred_check_branch
          %265 = sbr.rel (%p263) target = $region52
        $region51: #{tpu_custom_call.1} parent=39 // pred_region
          %266 = dma.done [#allocation6], 16
        $region52: #{tpu_custom_call.1} parent=39 // pred_fallthru
          _
        // Predicated region
        $region53: #{tpu_custom_call.1} parent=39 // pred_check
          %p267 = pneg %p108
        $region54: #{tpu_custom_call.1} parent=39 // pred_check_branch
          %269 = sbr.rel (%p267) target = $region56
        $region55: #{tpu_custom_call.1} parent=39 // pred_region
          %270 = dma.done [#allocation9], 4608
        $region56: #{tpu_custom_call.1} parent=39 // pred_fallthru
          _
        // Predicated region
        $region57: #{tpu_custom_call.1} parent=39 // pred_check
          %p271 = pneg %p129
        $region58: #{tpu_custom_call.1} parent=39 // pred_check_branch
          %273 = sbr.rel (%p271) target = $region60
        $region59: #{tpu_custom_call.1} parent=39 // pred_region
          %274 = dma.done [#allocation9], 16
        $region60: #{tpu_custom_call.1} parent=39 // pred_fallthru
          _
        %s275 = sand.u32 %s32, 1
        %s276 = scalar_lea.sflag [#allocation3], %s275
        %s277 = sand.u32 %s32, 1
        %s278 = smul.addr %s277, 256
        %s279 = scalar_lea.vmem [#allocation2], %s278
        %p280 = pneg %p45
        %p281 = pneg %p42
        %p282 = pneg %p66
        %p283 = pneg %p63
        %p284 = pneg %p87
        %p285 = pneg %p84
        %p286 = pneg %p108
        %p287 = pneg %p105
        %p288 = pneg %p129
        %p289 = pneg %p126
        %p290 = pneg %p155
        %p291 = pneg %p152
        %s292 = sand.u32 %s142, 1
        %s293 = scalar_lea.sflag [#allocation4], %s292
        %s294 = sand.u32 %s142, 1
        %s295 = smul.addr %s294, 256
        %s296 = scalar_lea.vmem [#allocation11], %s295
        %v298 = vld [vmem:[%s254] sm:$0xff]
        %v299 = vld [vmem:[%s254 + $0x8] sm:$0xff]
        %v300 = vld [vmem:[%s254 + $0x10] sm:$0xff]
        %v301 = vld [vmem:[%s254 + $0x18] sm:$0xff]
        %v302 = vld [vmem:[%s254 + $0x20] sm:$0xff]
        %v303 = vld [vmem:[%s254 + $0x28] sm:$0xff]
        %v304 = vld [vmem:[%s254 + $0x30] sm:$0xff]
        %v305 = vld [vmem:[%s254 + $0x38] sm:$0xff]
        %v306 = vld [vmem:[%s254 + $0x40] sm:$0xff]
        %v307 = vld [vmem:[%s254 + $0x48] sm:$0xff]
        %v308 = vld [vmem:[%s254 + $0x50] sm:$0xff]
        %v309 = vld [vmem:[%s254 + $0x58] sm:$0xff]
        %v310 = vld [vmem:[%s254 + $0x60] sm:$0xff]
        %v311 = vld [vmem:[%s254 + $0x68] sm:$0xff]
        %v312 = vld [vmem:[%s254 + $0x70] sm:$0xff]
        %v313 = vld [vmem:[%s254 + $0x78] sm:$0xff]
        %v314 = vld [vmem:[%s254 + $0x80] sm:$0xff]
        %v315 = vld [vmem:[%s254 + $0x88] sm:$0xff]
        %v316 = vld [vmem:[%s254 + $0x90] sm:$0xff]
        %v317 = vld [vmem:[%s254 + $0x98] sm:$0xff]
        %v318 = vld [vmem:[%s254 + $0xa0] sm:$0xff]
        %v319 = vld [vmem:[%s254 + $0xa8] sm:$0xff]
        %v320 = vld [vmem:[%s254 + $0xb0] sm:$0xff]
        %v321 = vld [vmem:[%s254 + $0xb8] sm:$0xff]
        %v322 = vld [vmem:[%s254 + $0xc0] sm:$0xff]
        %v323 = vld [vmem:[%s254 + $0xc8] sm:$0xff]
        %v324 = vld [vmem:[%s254 + $0xd0] sm:$0xff]
        %v325 = vld [vmem:[%s254 + $0xd8] sm:$0xff]
        %v326 = vld [vmem:[%s254 + $0xe0] sm:$0xff]
        %v327 = vld [vmem:[%s254 + $0xe8] sm:$0xff]
        %v328 = vld [vmem:[%s254 + $0xf0] sm:$0xff]
        %v329 = vld [vmem:[%s254 + $0xf8] sm:$0xff]
        %v330 = vpack.c.bf16 %v299, %v298
        %v331 = vpack.c.bf16 %v301, %v300
        %v332 = vpack.c.bf16 %v303, %v302
        %v333 = vpack.c.bf16 %v305, %v304
        %v334 = vpack.c.bf16 %v307, %v306
        %v335 = vpack.c.bf16 %v309, %v308
        %v336 = vpack.c.bf16 %v311, %v310
        %v337 = vpack.c.bf16 %v313, %v312
        %v338 = vpack.c.bf16 %v315, %v314
        %v339 = vpack.c.bf16 %v317, %v316
        %v340 = vpack.c.bf16 %v319, %v318
        %v341 = vpack.c.bf16 %v321, %v320
        %v342 = vpack.c.bf16 %v323, %v322
        %v343 = vpack.c.bf16 %v325, %v324
        %v344 = vpack.c.bf16 %v327, %v326
        %v345 = vpack.c.bf16 %v329, %v328
        %v347 = vshrl.u32 0, 16
        %v349 = vrot.slane %v347, 7
        %v350 = vshll.u32 0, 16
        %v352 = vor.u32 %v349, %v350
        %v354 = vshrl.u32 %v330, 16
        %v356 = vrot.slane %v354, 7
        %v357 = vshll.u32 %v330, 16
        %v359 = vor.u32 %v356, %v357
        %v361 = vshrl.u32 %v331, 16
        %v363 = vrot.slane %v361, 7
        %v364 = vshll.u32 %v331, 16
        %v366 = vor.u32 %v363, %v364
        %v368 = vshrl.u32 %v332, 16
        %v370 = vrot.slane %v368, 7
        %v371 = vshll.u32 %v332, 16
        %v373 = vor.u32 %v370, %v371
        %v375 = vshrl.u32 %v333, 16
        %v377 = vrot.slane %v375, 7
        %v378 = vshll.u32 %v333, 16
        %v380 = vor.u32 %v377, %v378
        %v382 = vshrl.u32 %v334, 16
        %v384 = vrot.slane %v382, 7
        %v385 = vshll.u32 %v334, 16
        %v387 = vor.u32 %v384, %v385
        %v389 = vshrl.u32 %v335, 16
        %v391 = vrot.slane %v389, 7
        %v392 = vshll.u32 %v335, 16
        %v394 = vor.u32 %v391, %v392
        %v396 = vshrl.u32 %v336, 16
        %v398 = vrot.slane %v396, 7
        %v399 = vshll.u32 %v336, 16
        %v401 = vor.u32 %v398, %v399
        %v403 = vshrl.u32 %v337, 16
        %v405 = vrot.slane %v403, 7
        %v406 = vshll.u32 %v337, 16
        %v408 = vor.u32 %v405, %v406
        %v410 = vshrl.u32 %v338, 16
        %v412 = vrot.slane %v410, 7
        %v413 = vshll.u32 %v338, 16
        %v415 = vor.u32 %v412, %v413
        %v417 = vshrl.u32 %v339, 16
        %v419 = vrot.slane %v417, 7
        %v420 = vshll.u32 %v339, 16
        %v422 = vor.u32 %v419, %v420
        %v424 = vshrl.u32 %v340, 16
        %v426 = vrot.slane %v424, 7
        %v427 = vshll.u32 %v340, 16
        %v429 = vor.u32 %v426, %v427
        %v431 = vshrl.u32 %v341, 16
        %v433 = vrot.slane %v431, 7
        %v434 = vshll.u32 %v341, 16
        %v436 = vor.u32 %v433, %v434
        %v438 = vshrl.u32 %v342, 16
        %v440 = vrot.slane %v438, 7
        %v441 = vshll.u32 %v342, 16
        %v443 = vor.u32 %v440, %v441
        %v445 = vshrl.u32 %v343, 16
        %v447 = vrot.slane %v445, 7
        %v448 = vshll.u32 %v343, 16
        %v450 = vor.u32 %v447, %v448
        %v452 = vshrl.u32 %v344, 16
        %v454 = vrot.slane %v452, 7
        %v455 = vshll.u32 %v344, 16
        %v457 = vor.u32 %v454, %v455
        %vm474 = vcmask 1040384
        %vm475 = vsmask.f32 256
        %vm476 = vmand %vm474, %vm475
        %v477 = vsel %vm476, 0, %v352
        %v478 = vsel %vm476, 0, %v359
        %v479 = vsel %vm476, 0, %v366
        %v480 = vsel %vm476, 0, %v373
        %v481 = vsel %vm476, 0, %v380
        %v482 = vsel %vm476, 0, %v387
        %v483 = vsel %vm476, 0, %v394
        %v484 = vsel %vm476, 0, %v401
        %v485 = vsel %vm476, 0, %v408
        %v486 = vsel %vm476, 0, %v415
        %v487 = vsel %vm476, 0, %v422
        %v488 = vsel %vm476, 0, %v429
        %v489 = vsel %vm476, 0, %v436
        %v490 = vsel %vm476, 0, %v443
        %v491 = vsel %vm476, 0, %v450
        %v492 = vsel %vm476, 0, %v457
        %v493 = vrot.slane %v350, 1
        %v494 = vor.u32 %v347, %v493
        %v495 = vrot.slane %v357, 1
        %v496 = vor.u32 %v354, %v495
        %v497 = vrot.slane %v364, 1
        %v498 = vor.u32 %v361, %v497
        %v499 = vrot.slane %v371, 1
        %v500 = vor.u32 %v368, %v499
        %v501 = vrot.slane %v378, 1
        %v502 = vor.u32 %v375, %v501
        %v503 = vrot.slane %v385, 1
        %v504 = vor.u32 %v382, %v503
        %v505 = vrot.slane %v392, 1
        %v506 = vor.u32 %v389, %v505
        %v507 = vrot.slane %v399, 1
        %v508 = vor.u32 %v396, %v507
        %v509 = vrot.slane %v406, 1
        %v510 = vor.u32 %v403, %v509
        %v511 = vrot.slane %v413, 1
        %v512 = vor.u32 %v410, %v511
        %v513 = vrot.slane %v420, 1
        %v514 = vor.u32 %v417, %v513
        %v515 = vrot.slane %v427, 1
        %v516 = vor.u32 %v424, %v515
        %v517 = vrot.slane %v434, 1
        %v518 = vor.u32 %v431, %v517
        %v519 = vrot.slane %v441, 1
        %v520 = vor.u32 %v438, %v519
        %v521 = vrot.slane %v448, 1
        %v522 = vor.u32 %v445, %v521
        %v523 = vrot.slane %v455, 1
        %v524 = vor.u32 %v452, %v523
        %vm541 = vcmask 1047552
        %vm542 = vsmask.f32 7424
        %vm543 = vmand %vm541, %vm542
        %v544 = vsel %vm543, %v494, 0
        %v545 = vsel %vm543, %v496, 0
        %v546 = vsel %vm543, %v498, 0
        %v547 = vsel %vm543, %v500, 0
        %v548 = vsel %vm543, %v502, 0
        %v549 = vsel %vm543, %v504, 0
        %v550 = vsel %vm543, %v506, 0
        %v551 = vsel %vm543, %v508, 0
        %v552 = vsel %vm543, %v510, 0
        %v553 = vsel %vm543, %v512, 0
        %v554 = vsel %vm543, %v514, 0
        %v555 = vsel %vm543, %v516, 0
        %v556 = vsel %vm543, %v518, 0
        %v557 = vsel %vm543, %v520, 0
        %v558 = vsel %vm543, %v522, 0
        %v559 = vsel %vm543, %v524, 0
        %v561 = vshrl.u32 %v345, 16
        %v563 = vrot.slane %v561, 7
        %v564 = vshll.u32 %v345, 16
        %v566 = vor.u32 %v563, %v564
        %v568 = vsel %vm476, 0, %v566
        %v569 = vrot.slane %v564, 1
        %v570 = vor.u32 %v561, %v569
        %v572 = vsel %vm543, %v570, 0
        %589 = vrot.lane.b32.xlu0 0, 64
        %v590 = vpop.permute.xlu0 %589
        %591 = vrot.lane.b32.xlu0 %v330, 64
        %v592 = vpop.permute.xlu0 %591
        %593 = vrot.lane.b32.xlu0 %v331, 64
        %v594 = vpop.permute.xlu0 %593
        %595 = vrot.lane.b32.xlu0 %v332, 64
        %v596 = vpop.permute.xlu0 %595
        %597 = vrot.lane.b32.xlu0 %v333, 64
        %v598 = vpop.permute.xlu0 %597
        %599 = vrot.lane.b32.xlu0 %v334, 64
        %v600 = vpop.permute.xlu0 %599
        %601 = vrot.lane.b32.xlu0 %v335, 64
        %v602 = vpop.permute.xlu0 %601
        %603 = vrot.lane.b32.xlu0 %v336, 64
        %v604 = vpop.permute.xlu0 %603
        %605 = vrot.lane.b32.xlu0 %v337, 64
        %v606 = vpop.permute.xlu0 %605
        %607 = vrot.lane.b32.xlu0 %v338, 64
        %v608 = vpop.permute.xlu0 %607
        %609 = vrot.lane.b32.xlu0 %v339, 64
        %v610 = vpop.permute.xlu0 %609
        %611 = vrot.lane.b32.xlu0 %v340, 64
        %v612 = vpop.permute.xlu0 %611
        %613 = vrot.lane.b32.xlu0 %v341, 64
        %v614 = vpop.permute.xlu0 %613
        %615 = vrot.lane.b32.xlu0 %v342, 64
        %v616 = vpop.permute.xlu0 %615
        %617 = vrot.lane.b32.xlu0 %v343, 64
        %v618 = vpop.permute.xlu0 %617
        %619 = vrot.lane.b32.xlu0 %v344, 64
        %v620 = vpop.permute.xlu0 %619
        %637 = vrot.lane.b32.xlu0 %v478, 64
        %v638 = vpop.permute.xlu0 %637
        %639 = vrot.lane.b32.xlu0 %v479, 64
        %v640 = vpop.permute.xlu0 %639
        %641 = vrot.lane.b32.xlu0 %v480, 64
        %v642 = vpop.permute.xlu0 %641
        %643 = vrot.lane.b32.xlu0 %v481, 64
        %v644 = vpop.permute.xlu0 %643
        %645 = vrot.lane.b32.xlu0 %v482, 64
        %v646 = vpop.permute.xlu0 %645
        %647 = vrot.lane.b32.xlu0 %v483, 64
        %v648 = vpop.permute.xlu0 %647
        %649 = vrot.lane.b32.xlu0 %v484, 64
        %v650 = vpop.permute.xlu0 %649
        %651 = vrot.lane.b32.xlu0 %v485, 64
        %v652 = vpop.permute.xlu0 %651
        %653 = vrot.lane.b32.xlu0 %v486, 64
        %v654 = vpop.permute.xlu0 %653
        %655 = vrot.lane.b32.xlu0 %v487, 64
        %v656 = vpop.permute.xlu0 %655
        %657 = vrot.lane.b32.xlu0 %v488, 64
        %v658 = vpop.permute.xlu0 %657
        %659 = vrot.lane.b32.xlu0 %v489, 64
        %v660 = vpop.permute.xlu0 %659
        %661 = vrot.lane.b32.xlu0 %v490, 64
        %v662 = vpop.permute.xlu0 %661
        %663 = vrot.lane.b32.xlu0 %v491, 64
        %v664 = vpop.permute.xlu0 %663
        %665 = vrot.lane.b32.xlu0 %v492, 64
        %v666 = vpop.permute.xlu0 %665
        %667 = vrot.lane.b32.xlu0 %v568, 64
        %v668 = vpop.permute.xlu0 %667
        %685 = vrot.lane.b32.xlu0 %v545, 64
        %v686 = vpop.permute.xlu0 %685
        %687 = vrot.lane.b32.xlu0 %v546, 64
        %v688 = vpop.permute.xlu0 %687
        %689 = vrot.lane.b32.xlu0 %v547, 64
        %v690 = vpop.permute.xlu0 %689
        %691 = vrot.lane.b32.xlu0 %v548, 64
        %v692 = vpop.permute.xlu0 %691
        %693 = vrot.lane.b32.xlu0 %v549, 64
        %v694 = vpop.permute.xlu0 %693
        %695 = vrot.lane.b32.xlu0 %v550, 64
        %v696 = vpop.permute.xlu0 %695
        %697 = vrot.lane.b32.xlu0 %v551, 64
        %v698 = vpop.permute.xlu0 %697
        %699 = vrot.lane.b32.xlu0 %v552, 64
        %v700 = vpop.permute.xlu0 %699
        %701 = vrot.lane.b32.xlu0 %v553, 64
        %v702 = vpop.permute.xlu0 %701
        %703 = vrot.lane.b32.xlu0 %v554, 64
        %v704 = vpop.permute.xlu0 %703
        %705 = vrot.lane.b32.xlu0 %v555, 64
        %v706 = vpop.permute.xlu0 %705
        %707 = vrot.lane.b32.xlu0 %v556, 64
        %v708 = vpop.permute.xlu0 %707
        %709 = vrot.lane.b32.xlu0 %v557, 64
        %v710 = vpop.permute.xlu0 %709
        %711 = vrot.lane.b32.xlu0 %v558, 64
        %v712 = vpop.permute.xlu0 %711
        %713 = vrot.lane.b32.xlu0 %v559, 64
        %v714 = vpop.permute.xlu0 %713
        %715 = vrot.lane.b32.xlu0 %v572, 64
        %v716 = vpop.permute.xlu0 %715
        %718 = vrot.lane.b32.xlu0 %v345, 64
        %v719 = vpop.permute.xlu0 %718
        %vm720 = vcmask 523264
        %v723 = vsel %vm720, %v477, %v590
        %v727 = vsel %vm720, %v478, %v592
        %v731 = vsel %vm720, %v479, %v594
        %v735 = vsel %vm720, %v480, %v596
        %v739 = vsel %vm720, %v481, %v598
        %v743 = vsel %vm720, %v482, %v600
        %v747 = vsel %vm720, %v483, %v602
        %v751 = vsel %vm720, %v484, %v604
        %v755 = vsel %vm720, %v485, %v606
        %v759 = vsel %vm720, %v486, %v608
        %v763 = vsel %vm720, %v487, %v610
        %v767 = vsel %vm720, %v488, %v612
        %v771 = vsel %vm720, %v489, %v614
        %v775 = vsel %vm720, %v490, %v616
        %v779 = vsel %vm720, %v491, %v618
        %v783 = vsel %vm720, %v492, %v620
        %v787 = vsel %vm720, %v544, %v638
        %v791 = vsel %vm720, %v545, %v640
        %v795 = vsel %vm720, %v546, %v642
        %v799 = vsel %vm720, %v547, %v644
        %v803 = vsel %vm720, %v548, %v646
        %v807 = vsel %vm720, %v549, %v648
        %v811 = vsel %vm720, %v550, %v650
        %v815 = vsel %vm720, %v551, %v652
        %v819 = vsel %vm720, %v552, %v654
        %v823 = vsel %vm720, %v553, %v656
        %v827 = vsel %vm720, %v554, %v658
        %v831 = vsel %vm720, %v555, %v660
        %v835 = vsel %vm720, %v556, %v662
        %v839 = vsel %vm720, %v557, %v664
        %v843 = vsel %vm720, %v558, %v666
        %v847 = vsel %vm720, %v559, %v668
        %v850 = vsel %vm720, %v330, %v686
        %v853 = vsel %vm720, %v331, %v688
        %v856 = vsel %vm720, %v332, %v690
        %v859 = vsel %vm720, %v333, %v692
        %v862 = vsel %vm720, %v334, %v694
        %v865 = vsel %vm720, %v335, %v696
        %v868 = vsel %vm720, %v336, %v698
        %v871 = vsel %vm720, %v337, %v700
        %v874 = vsel %vm720, %v338, %v702
        %v877 = vsel %vm720, %v339, %v704
        %v880 = vsel %vm720, %v340, %v706
        %v883 = vsel %vm720, %v341, %v708
        %v886 = vsel %vm720, %v342, %v710
        %v889 = vsel %vm720, %v343, %v712
        %v892 = vsel %vm720, %v344, %v714
        %v895 = vsel %vm720, %v345, %v716
        %v899 = vsel %vm720, %v568, %v719
        %v901 = vld [vmem:[#allocation5] sm:$0xf]
        %v902 = vld [vmem:[#allocation5 + $0x4] sm:$0xf]
        %v903 = vld [vmem:[#allocation5 + $0x8] sm:$0xf]
        %v904 = vld [vmem:[#allocation5 + $0xc] sm:$0xf]
        %v905 = vld [vmem:[#allocation5 + $0x10] sm:$0xf]
        %v906 = vld [vmem:[#allocation5 + $0x14] sm:$0xf]
        %v907 = vld [vmem:[#allocation5 + $0x18] sm:$0xf]
        %v908 = vld [vmem:[#allocation5 + $0x1c] sm:$0xf]
        %v909 = vld [vmem:[#allocation5 + $0x20] sm:$0xf]
        %v910 = vld [vmem:[#allocation5 + $0x24] sm:$0xf]
        %v911 = vld [vmem:[#allocation5 + $0x28] sm:$0xf]
        %v912 = vld [vmem:[#allocation5 + $0x2c] sm:$0xf]
        %v913 = vld [vmem:[#allocation5 + $0x30] sm:$0xf]
        %v914 = vld [vmem:[#allocation5 + $0x34] sm:$0xf]
        %v915 = vld [vmem:[#allocation5 + $0x38] sm:$0xf]
        %v916 = vld [vmem:[#allocation5 + $0x3c] sm:$0xf]
        %v917 = vld [vmem:[#allocation5 + $0x40] sm:$0xf]
        %v918 = vld [vmem:[#allocation5 + $0x44] sm:$0xf]
        %v919 = vld [vmem:[#allocation5 + $0x48] sm:$0xf]
        %v920 = vld [vmem:[#allocation5 + $0x4c] sm:$0xf]
        %v921 = vld [vmem:[#allocation5 + $0x50] sm:$0xf]
        %v922 = vld [vmem:[#allocation5 + $0x54] sm:$0xf]
        %v923 = vld [vmem:[#allocation5 + $0x58] sm:$0xf]
        %v924 = vld [vmem:[#allocation5 + $0x5c] sm:$0xf]
        %v925 = vld [vmem:[#allocation5 + $0x60] sm:$0xf]
        %v926 = vld [vmem:[#allocation5 + $0x64] sm:$0xf]
        %v927 = vld [vmem:[#allocation5 + $0x68] sm:$0xf]
        %v928 = vld [vmem:[#allocation5 + $0x6c] sm:$0xf]
        %v929 = vld [vmem:[#allocation5 + $0x70] sm:$0xf]
        %v930 = vld [vmem:[#allocation5 + $0x74] sm:$0xf]
        %v931 = vld [vmem:[#allocation5 + $0x78] sm:$0xf]
        %v932 = vld [vmem:[#allocation5 + $0x7c] sm:$0xf]
        %v933 = vld [vmem:[#allocation5 + $0x80] sm:$0xf]
        %v934 = vld [vmem:[#allocation5 + $0x84] sm:$0xf]
        %v935 = vld [vmem:[#allocation5 + $0x88] sm:$0xf]
        %v936 = vld [vmem:[#allocation5 + $0x8c] sm:$0xf]
        %v937 = vld [vmem:[#allocation5 + $0x90] sm:$0xf]
        %v938 = vld [vmem:[#allocation5 + $0x94] sm:$0xf]
        %v939 = vld [vmem:[#allocation5 + $0x98] sm:$0xf]
        %v940 = vld [vmem:[#allocation5 + $0x9c] sm:$0xf]
        %v941 = vld [vmem:[#allocation5 + $0xa0] sm:$0xf]
        %v942 = vld [vmem:[#allocation5 + $0xa4] sm:$0xf]
        %v943 = vld [vmem:[#allocation5 + $0xa8] sm:$0xf]
        %v944 = vld [vmem:[#allocation5 + $0xac] sm:$0xf]
        %v945 = vld [vmem:[#allocation5 + $0xb0] sm:$0xf]
        %v946 = vld [vmem:[#allocation5 + $0xb4] sm:$0xf]
        %v947 = vld [vmem:[#allocation5 + $0xb8] sm:$0xf]
        %v948 = vld [vmem:[#allocation5 + $0xbc] sm:$0xf]
        %v949 = vld [vmem:[#allocation5 + $0xc0] sm:$0xf]
        %v950 = vld [vmem:[#allocation5 + $0xc4] sm:$0xf]
        %v951 = vld [vmem:[#allocation5 + $0xc8] sm:$0xf]
        %v952 = vld [vmem:[#allocation5 + $0xcc] sm:$0xf]
        %v953 = vld [vmem:[#allocation5 + $0xd0] sm:$0xf]
        %v954 = vld [vmem:[#allocation5 + $0xd4] sm:$0xf]
        %v955 = vld [vmem:[#allocation5 + $0xd8] sm:$0xf]
        %v956 = vld [vmem:[#allocation5 + $0xdc] sm:$0xf]
        %v957 = vld [vmem:[#allocation5 + $0xe0] sm:$0xf]
        %v958 = vld [vmem:[#allocation5 + $0xe4] sm:$0xf]
        %v959 = vld [vmem:[#allocation5 + $0xe8] sm:$0xf]
        %v960 = vld [vmem:[#allocation5 + $0xec] sm:$0xf]
        %v961 = vld [vmem:[#allocation5 + $0xf0] sm:$0xf]
        %v962 = vld [vmem:[#allocation5 + $0xf4] sm:$0xf]
        %v963 = vld [vmem:[#allocation5 + $0xf8] sm:$0xf]
        %v964 = vld [vmem:[#allocation5 + $0xfc] sm:$0xf]
        %v965 = vld [vmem:[#allocation5 + $0x100] sm:$0xf]
        %v966 = vld [vmem:[#allocation5 + $0x104] sm:$0xf]
        %v967 = vld [vmem:[#allocation5 + $0x108] sm:$0xf]
        %v968 = vld [vmem:[#allocation5 + $0x10c] sm:$0xf]
        %v969 = vld [vmem:[#allocation5 + $0x110] sm:$0xf]
        %v970 = vld [vmem:[#allocation5 + $0x114] sm:$0xf]
        %v971 = vld [vmem:[#allocation5 + $0x118] sm:$0xf]
        %v972 = vld [vmem:[#allocation5 + $0x11c] sm:$0xf]
        %v973 = vld [vmem:[#allocation7] sm:$0x1]
        %v975 = vlaneseq
        %v976 = vshrl.u32 %v975, 7
        %v977 = vsub.s32 0, %v976
        %v978 = vrot.slane %v973, %v977
        %v1052 = vunpack.c.l.b16 %v901
        %v1053 = vunpack.c.l.b16 %v902
        %v1054 = vunpack.c.l.b16 %v903
        %v1055 = vunpack.c.l.b16 %v904
        %v1056 = vunpack.c.l.b16 %v905
        %v1057 = vunpack.c.l.b16 %v906
        %v1058 = vunpack.c.l.b16 %v907
        %v1059 = vunpack.c.l.b16 %v908
        %v1060 = vunpack.c.l.b16 %v909
        %v1061 = vunpack.c.l.b16 %v910
        %v1062 = vunpack.c.l.b16 %v911
        %v1063 = vunpack.c.l.b16 %v912
        %v1064 = vunpack.c.l.b16 %v913
        %v1065 = vunpack.c.l.b16 %v914
        %v1066 = vunpack.c.l.b16 %v915
        %v1067 = vunpack.c.l.b16 %v916
        %v1068 = vunpack.c.l.b16 %v917
        %v1069 = vunpack.c.l.b16 %v918
        %v1070 = vunpack.c.l.b16 %v919
        %v1071 = vunpack.c.l.b16 %v920
        %v1072 = vunpack.c.l.b16 %v921
        %v1073 = vunpack.c.l.b16 %v922
        %v1074 = vunpack.c.l.b16 %v923
        %v1075 = vunpack.c.l.b16 %v924
        %v1076 = vunpack.c.l.b16 %v925
        %v1077 = vunpack.c.l.b16 %v926
        %v1078 = vunpack.c.l.b16 %v927
        %v1079 = vunpack.c.l.b16 %v928
        %v1080 = vunpack.c.l.b16 %v929
        %v1081 = vunpack.c.l.b16 %v930
        %v1082 = vunpack.c.l.b16 %v931
        %v1083 = vunpack.c.l.b16 %v932
        %v1084 = vunpack.c.l.b16 %v933
        %v1085 = vunpack.c.l.b16 %v934
        %v1086 = vunpack.c.l.b16 %v935
        %v1087 = vunpack.c.l.b16 %v936
        %v1088 = vunpack.c.l.b16 %v937
        %v1089 = vunpack.c.l.b16 %v938
        %v1090 = vunpack.c.l.b16 %v939
        %v1091 = vunpack.c.l.b16 %v940
        %v1092 = vunpack.c.l.b16 %v941
        %v1093 = vunpack.c.l.b16 %v942
        %v1094 = vunpack.c.l.b16 %v943
        %v1095 = vunpack.c.l.b16 %v944
        %v1096 = vunpack.c.l.b16 %v945
        %v1097 = vunpack.c.l.b16 %v946
        %v1098 = vunpack.c.l.b16 %v947
        %v1099 = vunpack.c.l.b16 %v948
        %v1100 = vunpack.c.l.b16 %v949
        %v1101 = vunpack.c.l.b16 %v950
        %v1102 = vunpack.c.l.b16 %v951
        %v1103 = vunpack.c.l.b16 %v952
        %v1104 = vunpack.c.l.b16 %v953
        %v1105 = vunpack.c.l.b16 %v954
        %v1106 = vunpack.c.l.b16 %v955
        %v1107 = vunpack.c.l.b16 %v956
        %v1108 = vunpack.c.l.b16 %v957
        %v1109 = vunpack.c.l.b16 %v958
        %v1110 = vunpack.c.l.b16 %v959
        %v1111 = vunpack.c.l.b16 %v960
        %v1112 = vunpack.c.l.b16 %v961
        %v1113 = vunpack.c.l.b16 %v962
        %v1114 = vunpack.c.l.b16 %v963
        %v1115 = vunpack.c.l.b16 %v964
        %v1116 = vunpack.c.l.b16 %v965
        %v1117 = vunpack.c.l.b16 %v966
        %v1118 = vunpack.c.l.b16 %v967
        %v1119 = vunpack.c.l.b16 %v968
        %v1120 = vunpack.c.l.b16 %v969
        %v1121 = vunpack.c.l.b16 %v970
        %v1122 = vunpack.c.l.b16 %v971
        %v1123 = vunpack.c.l.b16 %v972
        %v1124 = vpack.c.b16 %v1053, %v1052
        %v1125 = vpack.c.b16 %v1055, %v1054
        %v1126 = vpack.c.b16 %v1057, %v1056
        %v1127 = vpack.c.b16 %v1059, %v1058
        %v1128 = vpack.c.b16 %v1061, %v1060
        %v1129 = vpack.c.b16 %v1063, %v1062
        %v1130 = vpack.c.b16 %v1065, %v1064
        %v1131 = vpack.c.b16 %v1067, %v1066
        %v1132 = vpack.c.b16 %v1069, %v1068
        %v1133 = vpack.c.b16 %v1071, %v1070
        %v1134 = vpack.c.b16 %v1073, %v1072
        %v1135 = vpack.c.b16 %v1075, %v1074
        %v1136 = vpack.c.b16 %v1077, %v1076
        %v1137 = vpack.c.b16 %v1079, %v1078
        %v1138 = vpack.c.b16 %v1081, %v1080
        %v1139 = vpack.c.b16 %v1083, %v1082
        %v1140 = vpack.c.b16 %v1085, %v1084
        %v1141 = vpack.c.b16 %v1087, %v1086
        %v1142 = vpack.c.b16 %v1089, %v1088
        %v1143 = vpack.c.b16 %v1091, %v1090
        %v1144 = vpack.c.b16 %v1093, %v1092
        %v1145 = vpack.c.b16 %v1095, %v1094
        %v1146 = vpack.c.b16 %v1097, %v1096
        %v1147 = vpack.c.b16 %v1099, %v1098
        %v1148 = vpack.c.b16 %v1101, %v1100
        %v1149 = vpack.c.b16 %v1103, %v1102
        %v1150 = vpack.c.b16 %v1105, %v1104
        %v1151 = vpack.c.b16 %v1107, %v1106
        %v1152 = vpack.c.b16 %v1109, %v1108
        %v1153 = vpack.c.b16 %v1111, %v1110
        %v1154 = vpack.c.b16 %v1113, %v1112
        %v1155 = vpack.c.b16 %v1115, %v1114
        %v1156 = vpack.c.b16 %v1117, %v1116
        %v1157 = vpack.c.b16 %v1119, %v1118
        %v1158 = vpack.c.b16 %v1121, %v1120
        %v1159 = vpack.c.b16 %v1123, %v1122
        %v1196 = vsel %vm720, %v546, 0
        %v1198 = vsel %vm720, %v547, 0
        %v1200 = vsel %vm720, %v548, 0
        %v1202 = vsel %vm720, %v549, 0
        %v1204 = vsel %vm720, %v550, 0
        %v1206 = vsel %vm720, %v551, 0
        %v1208 = vsel %vm720, %v552, 0
        %v1210 = vsel %vm720, %v553, 0
        %v1212 = vsel %vm720, %v554, 0
        %v1214 = vsel %vm720, %v555, 0
        %v1216 = vsel %vm720, %v556, 0
        %v1218 = vsel %vm720, %v557, 0
        %v1220 = vsel %vm720, %v558, 0
        %v1222 = vsel %vm720, %v559, 0
        %v1225 = vsel %vm720, %v572, 0
        %v1227 = vsel %vm720, %v544, 0
        %1229 = vmatprep.subr.bf16.mxu0 0
        %1230 = vmatpush1.bf16.msra.mxu0 %v1124
        %1231 = vmatprep.subr.bf16.mxu0 0
        %1232 = vmatpush1.bf16.msra.mxu0 %v1125
        %1233 = vmatprep.subr.bf16.mxu0 0
        %1234 = vmatpush1.bf16.msra.mxu0 %v1126
        %1235 = vmatprep.subr.bf16.mxu0 0
        %1236 = vmatpush1.bf16.msra.mxu0 %v1127
        %1237 = vmatprep.subr.bf16.mxu0 0
        %1238 = vmatpush1.bf16.msra.mxu0 %v1128
        %1239 = vmatprep.subr.bf16.mxu0 0
        %1240 = vmatpush1.bf16.msra.mxu0 %v1129
        %1241 = vmatprep.subr.bf16.mxu0 0
        %1242 = vmatpush1.bf16.msra.mxu0 %v1130
        %1243 = vmatprep.subr.bf16.mxu0 0
        %1244 = vmatpush1.bf16.msra.mxu0 %v1131
        %1245 = vmatprep.subr.bf16.mxu0 0
        %1246 = vmatpush1.bf16.msra.mxu0 %v1132
        %1247 = vmatprep.subr.bf16.mxu0 0
        %1248 = vmatpush1.bf16.msra.mxu0 %v1133
        %1249 = vmatprep.subr.bf16.mxu0 0
        %1250 = vmatpush1.bf16.msra.mxu0 %v1134
        %1251 = vmatprep.subr.bf16.mxu0 0
        %1252 = vmatpush1.bf16.msra.mxu0 %v1135
        %1253 = vmatprep.subr.bf16.mxu0 0
        %1254 = vmatpush1.bf16.msra.mxu0 %v1136
        %1255 = vmatprep.subr.bf16.mxu0 0
        %1256 = vmatpush1.bf16.msra.mxu0 %v1137
        %1257 = vmatprep.subr.bf16.mxu0 0
        %1258 = vmatpush1.bf16.msra.mxu0 %v1138
        %1259 = vmatprep.subr.bf16.mxu0 0
        %1260 = vmatpush1.bf16.msra.mxu0 %v1139
        %1261 = vmatprep.mubr.bf16.mxu0 %v787
        %1262 = vmatmul.mubr.bf16.gmra.mrb[0].mxu0 %v723
        %v1263 = vpop.f32.mrb[0].mxu0
        %v1264 = vadd.f32 %v978, %v1263
        %v1265 = vpop.f32.mrb[0].mxu0
        %v1266 = vpop.f32.mrb[0].mxu0
        %v1267 = vadd.f32 %v978, %v1266
        %v1268 = vpop.f32.mrb[0].mxu0
        %1269 = vmatprep.mubr.bf16.mxu0 %v791
        %1270 = vmatmul.mubr.bf16.gmra.mrb[0].mxu0 %v727
        %v1271 = vpop.f32.mrb[0].mxu0
        %v1272 = vadd.f32 %v978, %v1271
        %v1273 = vpop.f32.mrb[0].mxu0
        %v1274 = vpop.f32.mrb[0].mxu0
        %v1275 = vadd.f32 %v978, %v1274
        %v1276 = vpop.f32.mrb[0].mxu0
        %1277 = vmatprep.mubr.bf16.mxu0 %v795
        %1278 = vmatmul.mubr.bf16.gmra.mrb[0].mxu0 %v731
        %v1279 = vpop.f32.mrb[0].mxu0
        %v1280 = vadd.f32 %v978, %v1279
        %v1281 = vpop.f32.mrb[0].mxu0
        %v1282 = vpop.f32.mrb[0].mxu0
        %v1283 = vadd.f32 %v978, %v1282
        %v1284 = vpop.f32.mrb[0].mxu0
        %1285 = vmatprep.mubr.bf16.mxu0 %v799
        %1286 = vmatmul.mubr.bf16.gmra.mrb[0].mxu0 %v735
        %v1287 = vpop.f32.mrb[0].mxu0
        %v1288 = vadd.f32 %v978, %v1287
        %v1289 = vpop.f32.mrb[0].mxu0
        %v1290 = vpop.f32.mrb[0].mxu0
        %v1291 = vadd.f32 %v978, %v1290
        %v1292 = vpop.f32.mrb[0].mxu0
        %1293 = vmatprep.mubr.bf16.mxu0 %v803
        %1294 = vmatmul.mubr.bf16.gmra.mrb[0].mxu0 %v739
        %v1295 = vpop.f32.mrb[0].mxu0
        %v1296 = vadd.f32 %v978, %v1295
        %v1297 = vpop.f32.mrb[0].mxu0
        %v1298 = vpop.f32.mrb[0].mxu0
        %v1299 = vadd.f32 %v978, %v1298
        %v1300 = vpop.f32.mrb[0].mxu0
        %1301 = vmatprep.mubr.bf16.mxu0 %v807
        %1302 = vmatmul.mubr.bf16.gmra.mrb[0].mxu0 %v743
        %v1303 = vpop.f32.mrb[0].mxu0
        %v1304 = vadd.f32 %v978, %v1303
        %v1305 = vpop.f32.mrb[0].mxu0
        %v1306 = vpop.f32.mrb[0].mxu0
        %v1307 = vadd.f32 %v978, %v1306
        %v1308 = vpop.f32.mrb[0].mxu0
        %1309 = vmatprep.mubr.bf16.mxu0 %v811
        %1310 = vmatmul.mubr.bf16.gmra.mrb[0].mxu0 %v747
        %v1311 = vpop.f32.mrb[0].mxu0
        %v1312 = vadd.f32 %v978, %v1311
        %v1313 = vpop.f32.mrb[0].mxu0
        %v1314 = vpop.f32.mrb[0].mxu0
        %v1315 = vadd.f32 %v978, %v1314
        %v1316 = vpop.f32.mrb[0].mxu0
        %1317 = vmatprep.mubr.bf16.mxu0 %v815
        %1318 = vmatmul.mubr.bf16.gmra.mrb[0].mxu0 %v751
        %v1319 = vpop.f32.mrb[0].mxu0
        %v1320 = vadd.f32 %v978, %v1319
        %v1321 = vpop.f32.mrb[0].mxu0
        %v1322 = vpop.f32.mrb[0].mxu0
        %v1323 = vadd.f32 %v978, %v1322
        %v1324 = vpop.f32.mrb[0].mxu0
        %1325 = vmatprep.mubr.bf16.mxu0 %v819
        %1326 = vmatmul.mubr.bf16.gmra.mrb[0].mxu0 %v755
        %v1327 = vpop.f32.mrb[0].mxu0
        %v1328 = vadd.f32 %v978, %v1327
        %v1329 = vpop.f32.mrb[0].mxu0
        %v1330 = vpop.f32.mrb[0].mxu0
        %v1331 = vadd.f32 %v978, %v1330
        %v1332 = vpop.f32.mrb[0].mxu0
        %1333 = vmatprep.mubr.bf16.mxu0 %v823
        %1334 = vmatmul.mubr.bf16.gmra.mrb[0].mxu0 %v759
        %v1335 = vpop.f32.mrb[0].mxu0
        %v1336 = vadd.f32 %v978, %v1335
        %v1337 = vpop.f32.mrb[0].mxu0
        %v1338 = vpop.f32.mrb[0].mxu0
        %v1339 = vadd.f32 %v978, %v1338
        %v1340 = vpop.f32.mrb[0].mxu0
        %1341 = vmatprep.mubr.bf16.mxu0 %v827
        %1342 = vmatmul.mubr.bf16.gmra.mrb[0].mxu0 %v763
        %v1343 = vpop.f32.mrb[0].mxu0
        %v1344 = vadd.f32 %v978, %v1343
        %v1345 = vpop.f32.mrb[0].mxu0
        %v1346 = vpop.f32.mrb[0].mxu0
        %v1347 = vadd.f32 %v978, %v1346
        %v1348 = vpop.f32.mrb[0].mxu0
        %1349 = vmatprep.mubr.bf16.mxu0 %v831
        %1350 = vmatmul.mubr.bf16.gmra.mrb[0].mxu0 %v767
        %v1351 = vpop.f32.mrb[0].mxu0
        %v1352 = vadd.f32 %v978, %v1351
        %v1353 = vpop.f32.mrb[0].mxu0
        %v1354 = vpop.f32.mrb[0].mxu0
        %v1355 = vadd.f32 %v978, %v1354
        %v1356 = vpop.f32.mrb[0].mxu0
        %1357 = vmatprep.mubr.bf16.mxu0 %v835
        %1358 = vmatmul.mubr.bf16.gmra.mrb[0].mxu0 %v771
        %v1359 = vpop.f32.mrb[0].mxu0
        %v1360 = vadd.f32 %v978, %v1359
        %v1361 = vpop.f32.mrb[0].mxu0
        %v1362 = vpop.f32.mrb[0].mxu0
        %v1363 = vadd.f32 %v978, %v1362
        %v1364 = vpop.f32.mrb[0].mxu0
        %1365 = vmatprep.mubr.bf16.mxu0 %v839
        %1366 = vmatmul.mubr.bf16.gmra.mrb[0].mxu0 %v775
        %v1367 = vpop.f32.mrb[0].mxu0
        %v1368 = vadd.f32 %v978, %v1367
        %v1369 = vpop.f32.mrb[0].mxu0
        %v1370 = vpop.f32.mrb[0].mxu0
        %v1371 = vadd.f32 %v978, %v1370
        %v1372 = vpop.f32.mrb[0].mxu0
        %1373 = vmatprep.mubr.bf16.mxu0 %v843
        %1374 = vmatmul.mubr.bf16.gmra.mrb[0].mxu0 %v779
        %v1375 = vpop.f32.mrb[0].mxu0
        %v1376 = vadd.f32 %v978, %v1375
        %v1377 = vpop.f32.mrb[0].mxu0
        %v1378 = vpop.f32.mrb[0].mxu0
        %v1379 = vadd.f32 %v978, %v1378
        %v1380 = vpop.f32.mrb[0].mxu0
        %1381 = vmatprep.mubr.bf16.mxu0 %v847
        %1382 = vmatmul.mubr.bf16.gmra.mrb[0].mxu0 %v783
        %v1383 = vpop.f32.mrb[0].mxu0
        %v1384 = vadd.f32 %v978, %v1383
        %v1385 = vpop.f32.mrb[0].mxu0
        %v1386 = vpop.f32.mrb[0].mxu0
        %v1387 = vadd.f32 %v978, %v1386
        %v1388 = vpop.f32.mrb[0].mxu0
        %1389 = vdwg.mxu0
        %1390 = vmatprep.subr.bf16.mxu0 0
        %1391 = vmatpush1.bf16.msra.mxu0 %v1140
        %1392 = vmatprep.subr.bf16.mxu0 0
        %1393 = vmatpush1.bf16.msra.mxu0 %v1141
        %1394 = vmatprep.subr.bf16.mxu0 0
        %1395 = vmatpush1.bf16.msra.mxu0 %v1142
        %1396 = vmatprep.subr.bf16.mxu0 0
        %1397 = vmatpush1.bf16.msra.mxu0 %v1143
        %1398 = vmatprep.subr.bf16.mxu0 0
        %1399 = vmatpush1.bf16.msra.mxu0 %v1144
        %1400 = vmatprep.subr.bf16.mxu0 0
        %1401 = vmatpush1.bf16.msra.mxu0 %v1145
        %1402 = vmatprep.subr.bf16.mxu0 0
        %1403 = vmatpush1.bf16.msra.mxu0 %v1146
        %1404 = vmatprep.subr.bf16.mxu0 0
        %1405 = vmatpush1.bf16.msra.mxu0 %v1147
        %1406 = vmatprep.subr.bf16.mxu0 0
        %1407 = vmatpush1.bf16.msra.mxu0 %v1148
        %1408 = vmatprep.subr.bf16.mxu0 0
        %1409 = vmatpush1.bf16.msra.mxu0 %v1149
        %1410 = vmatprep.subr.bf16.mxu0 0
        %1411 = vmatpush1.bf16.msra.mxu0 %v1150
        %1412 = vmatprep.subr.bf16.mxu0 0
        %1413 = vmatpush1.bf16.msra.mxu0 %v1151
        %1414 = vmatprep.subr.bf16.mxu0 0
        %1415 = vmatpush1.bf16.msra.mxu0 %v1152
        %1416 = vmatprep.subr.bf16.mxu0 0
        %1417 = vmatpush1.bf16.msra.mxu0 %v1153
        %1418 = vmatprep.subr.bf16.mxu0 0
        %1419 = vmatpush1.bf16.msra.mxu0 %v1154
        %1420 = vmatprep.subr.bf16.mxu0 0
        %1421 = vmatpush1.bf16.msra.mxu0 %v1155
        %1422 = vmatprep.mubr.bf16.mxu0 %v731
        %1423 = vmatmul.mubr.bf16.gmra.mrb[0].mxu0 %v850
        %v1424 = vpop.f32.mrb[0].mxu0
        %v1425 = vadd.f32 %v1264, %v1424
        %v1426 = vpop.f32.mrb[0].mxu0
        %v1427 = vpop.f32.mrb[0].mxu0
        %v1428 = vadd.f32 %v1267, %v1427
        %v1429 = vpop.f32.mrb[0].mxu0
        %1430 = vmatprep.mubr.bf16.mxu0 %v735
        %1431 = vmatmul.mubr.bf16.gmra.mrb[0].mxu0 %v853
        %v1432 = vpop.f32.mrb[0].mxu0
        %v1433 = vadd.f32 %v1272, %v1432
        %v1434 = vpop.f32.mrb[0].mxu0
        %v1435 = vpop.f32.mrb[0].mxu0
        %v1436 = vadd.f32 %v1275, %v1435
        %v1437 = vpop.f32.mrb[0].mxu0
        %1438 = vmatprep.mubr.bf16.mxu0 %v739
        %1439 = vmatmul.mubr.bf16.gmra.mrb[0].mxu0 %v856
        %v1440 = vpop.f32.mrb[0].mxu0
        %v1441 = vadd.f32 %v1280, %v1440
        %v1442 = vpop.f32.mrb[0].mxu0
        %v1443 = vpop.f32.mrb[0].mxu0
        %v1444 = vadd.f32 %v1283, %v1443
        %v1445 = vpop.f32.mrb[0].mxu0
        %1446 = vmatprep.mubr.bf16.mxu0 %v743
        %1447 = vmatmul.mubr.bf16.gmra.mrb[0].mxu0 %v859
        %v1448 = vpop.f32.mrb[0].mxu0
        %v1449 = vadd.f32 %v1288, %v1448
        %v1450 = vpop.f32.mrb[0].mxu0
        %v1451 = vpop.f32.mrb[0].mxu0
        %v1452 = vadd.f32 %v1291, %v1451
        %v1453 = vpop.f32.mrb[0].mxu0
        %1454 = vmatprep.mubr.bf16.mxu0 %v747
        %1455 = vmatmul.mubr.bf16.gmra.mrb[0].mxu0 %v862
        %v1456 = vpop.f32.mrb[0].mxu0
        %v1457 = vadd.f32 %v1296, %v1456
        %v1458 = vpop.f32.mrb[0].mxu0
        %v1459 = vpop.f32.mrb[0].mxu0
        %v1460 = vadd.f32 %v1299, %v1459
        %v1461 = vpop.f32.mrb[0].mxu0
        %1462 = vmatprep.mubr.bf16.mxu0 %v751
        %1463 = vmatmul.mubr.bf16.gmra.mrb[0].mxu0 %v865
        %v1464 = vpop.f32.mrb[0].mxu0
        %v1465 = vadd.f32 %v1304, %v1464
        %v1466 = vpop.f32.mrb[0].mxu0
        %v1467 = vpop.f32.mrb[0].mxu0
        %v1468 = vadd.f32 %v1307, %v1467
        %v1469 = vpop.f32.mrb[0].mxu0
        %1470 = vmatprep.mubr.bf16.mxu0 %v755
        %1471 = vmatmul.mubr.bf16.gmra.mrb[0].mxu0 %v868
        %v1472 = vpop.f32.mrb[0].mxu0
        %v1473 = vadd.f32 %v1312, %v1472
        %v1474 = vpop.f32.mrb[0].mxu0
        %v1475 = vpop.f32.mrb[0].mxu0
        %v1476 = vadd.f32 %v1315, %v1475
        %v1477 = vpop.f32.mrb[0].mxu0
        %1478 = vmatprep.mubr.bf16.mxu0 %v759
        %1479 = vmatmul.mubr.bf16.gmra.mrb[0].mxu0 %v871
        %v1480 = vpop.f32.mrb[0].mxu0
        %v1481 = vadd.f32 %v1320, %v1480
        %v1482 = vpop.f32.mrb[0].mxu0
        %v1483 = vpop.f32.mrb[0].mxu0
        %v1484 = vadd.f32 %v1323, %v1483
        %v1485 = vpop.f32.mrb[0].mxu0
        %1486 = vmatprep.mubr.bf16.mxu0 %v763
        %1487 = vmatmul.mubr.bf16.gmra.mrb[0].mxu0 %v874
        %v1488 = vpop.f32.mrb[0].mxu0
        %v1489 = vadd.f32 %v1328, %v1488
        %v1490 = vpop.f32.mrb[0].mxu0
        %v1491 = vpop.f32.mrb[0].mxu0
        %v1492 = vadd.f32 %v1331, %v1491
        %v1493 = vpop.f32.mrb[0].mxu0
        %1494 = vmatprep.mubr.bf16.mxu0 %v767
        %1495 = vmatmul.mubr.bf16.gmra.mrb[0].mxu0 %v877
        %v1496 = vpop.f32.mrb[0].mxu0
        %v1497 = vadd.f32 %v1336, %v1496
        %v1498 = vpop.f32.mrb[0].mxu0
        %v1499 = vpop.f32.mrb[0].mxu0
        %v1500 = vadd.f32 %v1339, %v1499
        %v1501 = vpop.f32.mrb[0].mxu0
        %1502 = vmatprep.mubr.bf16.mxu0 %v771
        %1503 = vmatmul.mubr.bf16.gmra.mrb[0].mxu0 %v880
        %v1504 = vpop.f32.mrb[0].mxu0
        %v1505 = vadd.f32 %v1344, %v1504
        %v1506 = vpop.f32.mrb[0].mxu0
        %v1507 = vpop.f32.mrb[0].mxu0
        %v1508 = vadd.f32 %v1347, %v1507
        %v1509 = vpop.f32.mrb[0].mxu0
        %1510 = vmatprep.mubr.bf16.mxu0 %v775
        %1511 = vmatmul.mubr.bf16.gmra.mrb[0].mxu0 %v883
        %v1512 = vpop.f32.mrb[0].mxu0
        %v1513 = vadd.f32 %v1352, %v1512
        %v1514 = vpop.f32.mrb[0].mxu0
        %v1515 = vpop.f32.mrb[0].mxu0
        %v1516 = vadd.f32 %v1355, %v1515
        %v1517 = vpop.f32.mrb[0].mxu0
        %1518 = vmatprep.mubr.bf16.mxu0 %v779
        %1519 = vmatmul.mubr.bf16.gmra.mrb[0].mxu0 %v886
        %v1520 = vpop.f32.mrb[0].mxu0
        %v1521 = vadd.f32 %v1360, %v1520
        %v1522 = vpop.f32.mrb[0].mxu0
        %v1523 = vpop.f32.mrb[0].mxu0
        %v1524 = vadd.f32 %v1363, %v1523
        %v1525 = vpop.f32.mrb[0].mxu0
        %1526 = vmatprep.mubr.bf16.mxu0 %v783
        %1527 = vmatmul.mubr.bf16.gmra.mrb[0].mxu0 %v889
        %v1528 = vpop.f32.mrb[0].mxu0
        %v1529 = vadd.f32 %v1368, %v1528
        %v1530 = vpop.f32.mrb[0].mxu0
        %v1531 = vpop.f32.mrb[0].mxu0
        %v1532 = vadd.f32 %v1371, %v1531
        %v1533 = vpop.f32.mrb[0].mxu0
        %1534 = vmatprep.mubr.bf16.mxu0 %v899
        %1535 = vmatmul.mubr.bf16.gmra.mrb[0].mxu0 %v892
        %v1536 = vpop.f32.mrb[0].mxu0
        %v1537 = vadd.f32 %v1376, %v1536
        %v1538 = vpop.f32.mrb[0].mxu0
        %v1539 = vpop.f32.mrb[0].mxu0
        %v1540 = vadd.f32 %v1379, %v1539
        %v1541 = vpop.f32.mrb[0].mxu0
        %1542 = vmatprep.mubr.bf16.mxu0 %v723
        %1543 = vmatmul.mubr.bf16.gmra.mrb[0].mxu0 %v895
        %v1544 = vpop.f32.mrb[0].mxu0
        %v1545 = vadd.f32 %v1384, %v1544
        %v1546 = vpop.f32.mrb[0].mxu0
        %v1547 = vpop.f32.mrb[0].mxu0
        %v1548 = vadd.f32 %v1387, %v1547
        %v1549 = vpop.f32.mrb[0].mxu0
        %1550 = vdwg.mxu0
        %1551 = vmatprep.subr.bf16.mxu0 0
        %1552 = vmatpush1.bf16.msra.mxu0 %v1156
        %1553 = vmatprep.subr.bf16.mxu0 0
        %1554 = vmatpush1.bf16.msra.mxu0 %v1157
        %1555 = vmatprep.subr.bf16.mxu0 0
        %1556 = vmatpush1.bf16.msra.mxu0 %v1158
        %1557 = vmatprep.subr.bf16.mxu0 0
        %1558 = vmatpush1.bf16.msra.mxu0 %v1159
        %1559 = vmatprep.subr.bf16.mxu0 0
        %1560 = vmatpush1.bf16.msra.mxu0 0
        %1561 = vmatprep.subr.bf16.mxu0 0
        %1562 = vmatpush1.bf16.msra.mxu0 0
        %1563 = vmatprep.subr.bf16.mxu0 0
        %1564 = vmatpush1.bf16.msra.mxu0 0
        %1565 = vmatprep.subr.bf16.mxu0 0
        %1566 = vmatpush1.bf16.msra.mxu0 0
        %1567 = vmatprep.subr.bf16.mxu0 0
        %1568 = vmatpush1.bf16.msra.mxu0 0
        %1569 = vmatprep.subr.bf16.mxu0 0
        %1570 = vmatpush1.bf16.msra.mxu0 0
        %1571 = vmatprep.subr.bf16.mxu0 0
        %1572 = vmatpush1.bf16.msra.mxu0 0
        %1573 = vmatprep.subr.bf16.mxu0 0
        %1574 = vmatpush1.bf16.msra.mxu0 0
        %1575 = vmatprep.subr.bf16.mxu0 0
        %1576 = vmatpush1.bf16.msra.mxu0 0
        %1577 = vmatprep.subr.bf16.mxu0 0
        %1578 = vmatpush1.bf16.msra.mxu0 0
        %1579 = vmatprep.subr.bf16.mxu0 0
        %1580 = vmatpush1.bf16.msra.mxu0 0
        %1581 = vmatprep.subr.bf16.mxu0 0
        %1582 = vmatpush1.bf16.msra.mxu0 0
        %1583 = vmatprep.mubr.bf16.mxu0 0
        %1584 = vmatmul.mubr.bf16.gmra.mrb[0].mxu0 %v1196
        %v1585 = vpop.f32.mrb[0].mxu0
        %v1586 = vadd.f32 %v1425, %v1585
        %v1587 = vpop.f32.mrb[0].mxu0
        %v1588 = vpop.f32.mrb[0].mxu0
        %v1589 = vadd.f32 %v1428, %v1588
        %v1590 = vpop.f32.mrb[0].mxu0
        %1591 = vmatprep.mubr.bf16.mxu0 0
        %1592 = vmatmul.mubr.bf16.gmra.mrb[0].mxu0 %v1198
        %v1593 = vpop.f32.mrb[0].mxu0
        %v1594 = vadd.f32 %v1433, %v1593
        %v1595 = vpop.f32.mrb[0].mxu0
        %v1596 = vpop.f32.mrb[0].mxu0
        %v1597 = vadd.f32 %v1436, %v1596
        %v1598 = vpop.f32.mrb[0].mxu0
        %1599 = vmatprep.mubr.bf16.mxu0 0
        %1600 = vmatmul.mubr.bf16.gmra.mrb[0].mxu0 %v1200
        %v1601 = vpop.f32.mrb[0].mxu0
        %v1602 = vadd.f32 %v1441, %v1601
        %v1603 = vpop.f32.mrb[0].mxu0
        %v1604 = vpop.f32.mrb[0].mxu0
        %v1605 = vadd.f32 %v1444, %v1604
        %v1606 = vpop.f32.mrb[0].mxu0
        %1607 = vmatprep.mubr.bf16.mxu0 0
        %1608 = vmatmul.mubr.bf16.gmra.mrb[0].mxu0 %v1202
        %v1609 = vpop.f32.mrb[0].mxu0
        %v1610 = vadd.f32 %v1449, %v1609
        %v1611 = vpop.f32.mrb[0].mxu0
        %v1612 = vpop.f32.mrb[0].mxu0
        %v1613 = vadd.f32 %v1452, %v1612
        %v1614 = vpop.f32.mrb[0].mxu0
        %1615 = vmatprep.mubr.bf16.mxu0 0
        %1616 = vmatmul.mubr.bf16.gmra.mrb[0].mxu0 %v1204
        %v1617 = vpop.f32.mrb[0].mxu0
        %v1618 = vadd.f32 %v1457, %v1617
        %v1619 = vpop.f32.mrb[0].mxu0
        %v1620 = vpop.f32.mrb[0].mxu0
        %v1621 = vadd.f32 %v1460, %v1620
        %v1622 = vpop.f32.mrb[0].mxu0
        %1623 = vmatprep.mubr.bf16.mxu0 0
        %1624 = vmatmul.mubr.bf16.gmra.mrb[0].mxu0 %v1206
        %v1625 = vpop.f32.mrb[0].mxu0
        %v1626 = vadd.f32 %v1465, %v1625
        %v1627 = vpop.f32.mrb[0].mxu0
        %v1628 = vpop.f32.mrb[0].mxu0
        %v1629 = vadd.f32 %v1468, %v1628
        %v1630 = vpop.f32.mrb[0].mxu0
        %1631 = vmatprep.mubr.bf16.mxu0 0
        %1632 = vmatmul.mubr.bf16.gmra.mrb[0].mxu0 %v1208
        %v1633 = vpop.f32.mrb[0].mxu0
        %v1634 = vadd.f32 %v1473, %v1633
        %v1635 = vpop.f32.mrb[0].mxu0
        %v1636 = vpop.f32.mrb[0].mxu0
        %v1637 = vadd.f32 %v1476, %v1636
        %v1638 = vpop.f32.mrb[0].mxu0
        %1639 = vmatprep.mubr.bf16.mxu0 0
        %1640 = vmatmul.mubr.bf16.gmra.mrb[0].mxu0 %v1210
        %v1641 = vpop.f32.mrb[0].mxu0
        %v1642 = vadd.f32 %v1481, %v1641
        %v1643 = vpop.f32.mrb[0].mxu0
        %v1644 = vpop.f32.mrb[0].mxu0
        %v1645 = vadd.f32 %v1484, %v1644
        %v1646 = vpop.f32.mrb[0].mxu0
        %1647 = vmatprep.mubr.bf16.mxu0 0
        %1648 = vmatmul.mubr.bf16.gmra.mrb[0].mxu0 %v1212
        %v1649 = vpop.f32.mrb[0].mxu0
        %v1650 = vadd.f32 %v1489, %v1649
        %v1651 = vpop.f32.mrb[0].mxu0
        %v1652 = vpop.f32.mrb[0].mxu0
        %v1653 = vadd.f32 %v1492, %v1652
        %v1654 = vpop.f32.mrb[0].mxu0
        %1655 = vmatprep.mubr.bf16.mxu0 0
        %1656 = vmatmul.mubr.bf16.gmra.mrb[0].mxu0 %v1214
        %v1657 = vpop.f32.mrb[0].mxu0
        %v1658 = vadd.f32 %v1497, %v1657
        %v1659 = vpop.f32.mrb[0].mxu0
        %v1660 = vpop.f32.mrb[0].mxu0
        %v1661 = vadd.f32 %v1500, %v1660
        %v1662 = vpop.f32.mrb[0].mxu0
        %1663 = vmatprep.mubr.bf16.mxu0 0
        %1664 = vmatmul.mubr.bf16.gmra.mrb[0].mxu0 %v1216
        %v1665 = vpop.f32.mrb[0].mxu0
        %v1666 = vadd.f32 %v1505, %v1665
        %v1667 = vpop.f32.mrb[0].mxu0
        %v1668 = vpop.f32.mrb[0].mxu0
        %v1669 = vadd.f32 %v1508, %v1668
        %v1670 = vpop.f32.mrb[0].mxu0
        %1671 = vmatprep.mubr.bf16.mxu0 0
        %1672 = vmatmul.mubr.bf16.gmra.mrb[0].mxu0 %v1218
        %v1673 = vpop.f32.mrb[0].mxu0
        %v1674 = vadd.f32 %v1513, %v1673
        %v1675 = vpop.f32.mrb[0].mxu0
        %v1676 = vpop.f32.mrb[0].mxu0
        %v1677 = vadd.f32 %v1516, %v1676
        %v1678 = vpop.f32.mrb[0].mxu0
        %1679 = vmatprep.mubr.bf16.mxu0 0
        %1680 = vmatmul.mubr.bf16.gmra.mrb[0].mxu0 %v1220
        %v1681 = vpop.f32.mrb[0].mxu0
        %v1682 = vadd.f32 %v1521, %v1681
        %v1683 = vpop.f32.mrb[0].mxu0
        %v1684 = vpop.f32.mrb[0].mxu0
        %v1685 = vadd.f32 %v1524, %v1684
        %v1686 = vpop.f32.mrb[0].mxu0
        %1687 = vmatprep.mubr.bf16.mxu0 0
        %1688 = vmatmul.mubr.bf16.gmra.mrb[0].mxu0 %v1222
        %v1689 = vpop.f32.mrb[0].mxu0
        %v1690 = vadd.f32 %v1529, %v1689
        %v1691 = vpop.f32.mrb[0].mxu0
        %v1692 = vpop.f32.mrb[0].mxu0
        %v1693 = vadd.f32 %v1532, %v1692
        %v1694 = vpop.f32.mrb[0].mxu0
        %1695 = vmatprep.mubr.bf16.mxu0 0
        %1696 = vmatmul.mubr.bf16.gmra.mrb[0].mxu0 %v1225
        %v1697 = vpop.f32.mrb[0].mxu0
        %v1698 = vadd.f32 %v1537, %v1697
        %v1699 = vpop.f32.mrb[0].mxu0
        %v1700 = vpop.f32.mrb[0].mxu0
        %v1701 = vadd.f32 %v1540, %v1700
        %v1702 = vpop.f32.mrb[0].mxu0
        %1703 = vmatprep.mubr.bf16.mxu0 0
        %1704 = vmatmul.mubr.bf16.gmra.mrb[0].mxu0 %v1227
        %v1705 = vpop.f32.mrb[0].mxu0
        %v1706 = vadd.f32 %v1545, %v1705
        %v1707 = vpop.f32.mrb[0].mxu0
        %v1708 = vpop.f32.mrb[0].mxu0
        %v1709 = vadd.f32 %v1548, %v1708
        %v1710 = vpop.f32.mrb[0].mxu0
        %1711 = vdwg.mxu0
        %v1712 = vmax.f32 %v1586, 0.0
        %v1713 = vmax.f32 %v1589, 0.0
        %v1714 = vmax.f32 %v1594, 0.0
        %v1715 = vmax.f32 %v1597, 0.0
        %v1716 = vmax.f32 %v1602, 0.0
        %v1717 = vmax.f32 %v1605, 0.0
        %v1718 = vmax.f32 %v1610, 0.0
        %v1719 = vmax.f32 %v1613, 0.0
        %v1720 = vmax.f32 %v1618, 0.0
        %v1721 = vmax.f32 %v1621, 0.0
        %v1722 = vmax.f32 %v1626, 0.0
        %v1723 = vmax.f32 %v1629, 0.0
        %v1724 = vmax.f32 %v1634, 0.0
        %v1725 = vmax.f32 %v1637, 0.0
        %v1726 = vmax.f32 %v1642, 0.0
        %v1727 = vmax.f32 %v1645, 0.0
        %v1728 = vmax.f32 %v1650, 0.0
        %v1729 = vmax.f32 %v1653, 0.0
        %v1730 = vmax.f32 %v1658, 0.0
        %v1731 = vmax.f32 %v1661, 0.0
        %v1732 = vmax.f32 %v1666, 0.0
        %v1733 = vmax.f32 %v1669, 0.0
        %v1734 = vmax.f32 %v1674, 0.0
        %v1735 = vmax.f32 %v1677, 0.0
        %v1736 = vmax.f32 %v1682, 0.0
        %v1737 = vmax.f32 %v1685, 0.0
        %v1738 = vmax.f32 %v1690, 0.0
        %v1739 = vmax.f32 %v1693, 0.0
        %v1740 = vmax.f32 %v1698, 0.0
        %v1741 = vmax.f32 %v1701, 0.0
        %v1742 = vmax.f32 %v1706, 0.0
        %v1743 = vmax.f32 %v1709, 0.0
        %v1744 = vpack.c.bf16 %v1713, %v1712
        %v1745 = vpack.c.bf16 %v1715, %v1714
        %v1746 = vpack.c.bf16 %v1717, %v1716
        %v1747 = vpack.c.bf16 %v1719, %v1718
        %v1748 = vpack.c.bf16 %v1721, %v1720
        %v1749 = vpack.c.bf16 %v1723, %v1722
        %v1750 = vpack.c.bf16 %v1725, %v1724
        %v1751 = vpack.c.bf16 %v1727, %v1726
        %v1752 = vpack.c.bf16 %v1729, %v1728
        %v1753 = vpack.c.bf16 %v1731, %v1730
        %v1754 = vpack.c.bf16 %v1733, %v1732
        %v1755 = vpack.c.bf16 %v1735, %v1734
        %v1756 = vpack.c.bf16 %v1737, %v1736
        %v1757 = vpack.c.bf16 %v1739, %v1738
        %v1758 = vpack.c.bf16 %v1741, %v1740
        %v1759 = vpack.c.bf16 %v1743, %v1742
        %v1761 = vshrl.u32 %v1744, 16
        %v1763 = vrot.slane %v1761, 7
        %v1764 = vshll.u32 %v1744, 16
        %v1766 = vor.u32 %v1763, %v1764
        %v1768 = vshrl.u32 %v1745, 16
        %v1770 = vrot.slane %v1768, 7
        %v1771 = vshll.u32 %v1745, 16
        %v1773 = vor.u32 %v1770, %v1771
        %v1775 = vshrl.u32 %v1746, 16
        %v1777 = vrot.slane %v1775, 7
        %v1778 = vshll.u32 %v1746, 16
        %v1780 = vor.u32 %v1777, %v1778
        %v1782 = vshrl.u32 %v1747, 16
        %v1784 = vrot.slane %v1782, 7
        %v1785 = vshll.u32 %v1747, 16
        %v1787 = vor.u32 %v1784, %v1785
        %v1789 = vshrl.u32 %v1748, 16
        %v1791 = vrot.slane %v1789, 7
        %v1792 = vshll.u32 %v1748, 16
        %v1794 = vor.u32 %v1791, %v1792
        %v1796 = vshrl.u32 %v1749, 16
        %v1798 = vrot.slane %v1796, 7
        %v1799 = vshll.u32 %v1749, 16
        %v1801 = vor.u32 %v1798, %v1799
        %v1803 = vshrl.u32 %v1750, 16
        %v1805 = vrot.slane %v1803, 7
        %v1806 = vshll.u32 %v1750, 16
        %v1808 = vor.u32 %v1805, %v1806
        %v1810 = vshrl.u32 %v1751, 16
        %v1812 = vrot.slane %v1810, 7
        %v1813 = vshll.u32 %v1751, 16
        %v1815 = vor.u32 %v1812, %v1813
        %v1817 = vshrl.u32 %v1752, 16
        %v1819 = vrot.slane %v1817, 7
        %v1820 = vshll.u32 %v1752, 16
        %v1822 = vor.u32 %v1819, %v1820
        %v1824 = vshrl.u32 %v1753, 16
        %v1826 = vrot.slane %v1824, 7
        %v1827 = vshll.u32 %v1753, 16
        %v1829 = vor.u32 %v1826, %v1827
        %v1831 = vshrl.u32 %v1754, 16
        %v1833 = vrot.slane %v1831, 7
        %v1834 = vshll.u32 %v1754, 16
        %v1836 = vor.u32 %v1833, %v1834
        %v1838 = vshrl.u32 %v1755, 16
        %v1840 = vrot.slane %v1838, 7
        %v1841 = vshll.u32 %v1755, 16
        %v1843 = vor.u32 %v1840, %v1841
        %v1845 = vshrl.u32 %v1756, 16
        %v1847 = vrot.slane %v1845, 7
        %v1848 = vshll.u32 %v1756, 16
        %v1850 = vor.u32 %v1847, %v1848
        %v1852 = vshrl.u32 %v1757, 16
        %v1854 = vrot.slane %v1852, 7
        %v1855 = vshll.u32 %v1757, 16
        %v1857 = vor.u32 %v1854, %v1855
        %v1859 = vshrl.u32 %v1758, 16
        %v1861 = vrot.slane %v1859, 7
        %v1862 = vshll.u32 %v1758, 16
        %v1864 = vor.u32 %v1861, %v1862
        %v1880 = vsel %vm476, 0, %v1766
        %v1881 = vsel %vm476, 0, %v1773
        %v1882 = vsel %vm476, 0, %v1780
        %v1883 = vsel %vm476, 0, %v1787
        %v1884 = vsel %vm476, 0, %v1794
        %v1885 = vsel %vm476, 0, %v1801
        %v1886 = vsel %vm476, 0, %v1808
        %v1887 = vsel %vm476, 0, %v1815
        %v1888 = vsel %vm476, 0, %v1822
        %v1889 = vsel %vm476, 0, %v1829
        %v1890 = vsel %vm476, 0, %v1836
        %v1891 = vsel %vm476, 0, %v1843
        %v1892 = vsel %vm476, 0, %v1850
        %v1893 = vsel %vm476, 0, %v1857
        %v1894 = vsel %vm476, 0, %v1864
        %v1895 = vrot.slane %v1764, 1
        %v1896 = vor.u32 %v1761, %v1895
        %v1897 = vrot.slane %v1771, 1
        %v1898 = vor.u32 %v1768, %v1897
        %v1899 = vrot.slane %v1778, 1
        %v1900 = vor.u32 %v1775, %v1899
        %v1901 = vrot.slane %v1785, 1
        %v1902 = vor.u32 %v1782, %v1901
        %v1903 = vrot.slane %v1792, 1
        %v1904 = vor.u32 %v1789, %v1903
        %v1905 = vrot.slane %v1799, 1
        %v1906 = vor.u32 %v1796, %v1905
        %v1907 = vrot.slane %v1806, 1
        %v1908 = vor.u32 %v1803, %v1907
        %v1909 = vrot.slane %v1813, 1
        %v1910 = vor.u32 %v1810, %v1909
        %v1911 = vrot.slane %v1820, 1
        %v1912 = vor.u32 %v1817, %v1911
        %v1913 = vrot.slane %v1827, 1
        %v1914 = vor.u32 %v1824, %v1913
        %v1915 = vrot.slane %v1834, 1
        %v1916 = vor.u32 %v1831, %v1915
        %v1917 = vrot.slane %v1841, 1
        %v1918 = vor.u32 %v1838, %v1917
        %v1919 = vrot.slane %v1848, 1
        %v1920 = vor.u32 %v1845, %v1919
        %v1921 = vrot.slane %v1855, 1
        %v1922 = vor.u32 %v1852, %v1921
        %v1923 = vrot.slane %v1862, 1
        %v1924 = vor.u32 %v1859, %v1923
        %v1940 = vsel %vm543, %v1896, 0
        %v1941 = vsel %vm543, %v1898, 0
        %v1942 = vsel %vm543, %v1900, 0
        %v1943 = vsel %vm543, %v1902, 0
        %v1944 = vsel %vm543, %v1904, 0
        %v1945 = vsel %vm543, %v1906, 0
        %v1946 = vsel %vm543, %v1908, 0
        %v1947 = vsel %vm543, %v1910, 0
        %v1948 = vsel %vm543, %v1912, 0
        %v1949 = vsel %vm543, %v1914, 0
        %v1950 = vsel %vm543, %v1916, 0
        %v1951 = vsel %vm543, %v1918, 0
        %v1952 = vsel %vm543, %v1920, 0
        %v1953 = vsel %vm543, %v1922, 0
        %v1954 = vsel %vm543, %v1924, 0
        %v1956 = vshrl.u32 %v1759, 16
        %v1958 = vrot.slane %v1956, 7
        %v1959 = vshll.u32 %v1759, 16
        %v1961 = vor.u32 %v1958, %v1959
        %v1963 = vsel %vm476, 0, %v1961
        %v1964 = vrot.slane %v1959, 1
        %v1965 = vor.u32 %v1956, %v1964
        %v1967 = vsel %vm543, %v1965, 0
        %1983 = vrot.lane.b32.xlu0 %v1744, 64
        %v1984 = vpop.permute.xlu0 %1983
        %1985 = vrot.lane.b32.xlu0 %v1745, 64
        %v1986 = vpop.permute.xlu0 %1985
        %1987 = vrot.lane.b32.xlu0 %v1746, 64
        %v1988 = vpop.permute.xlu0 %1987
        %1989 = vrot.lane.b32.xlu0 %v1747, 64
        %v1990 = vpop.permute.xlu0 %1989
        %1991 = vrot.lane.b32.xlu0 %v1748, 64
        %v1992 = vpop.permute.xlu0 %1991
        %1993 = vrot.lane.b32.xlu0 %v1749, 64
        %v1994 = vpop.permute.xlu0 %1993
        %1995 = vrot.lane.b32.xlu0 %v1750, 64
        %v1996 = vpop.permute.xlu0 %1995
        %1997 = vrot.lane.b32.xlu0 %v1751, 64
        %v1998 = vpop.permute.xlu0 %1997
        %1999 = vrot.lane.b32.xlu0 %v1752, 64
        %v2000 = vpop.permute.xlu0 %1999
        %2001 = vrot.lane.b32.xlu0 %v1753, 64
        %v2002 = vpop.permute.xlu0 %2001
        %2003 = vrot.lane.b32.xlu0 %v1754, 64
        %v2004 = vpop.permute.xlu0 %2003
        %2005 = vrot.lane.b32.xlu0 %v1755, 64
        %v2006 = vpop.permute.xlu0 %2005
        %2007 = vrot.lane.b32.xlu0 %v1756, 64
        %v2008 = vpop.permute.xlu0 %2007
        %2009 = vrot.lane.b32.xlu0 %v1757, 64
        %v2010 = vpop.permute.xlu0 %2009
        %2011 = vrot.lane.b32.xlu0 %v1758, 64
        %v2012 = vpop.permute.xlu0 %2011
        %2029 = vrot.lane.b32.xlu0 %v1880, 64
        %v2030 = vpop.permute.xlu0 %2029
        %2031 = vrot.lane.b32.xlu0 %v1881, 64
        %v2032 = vpop.permute.xlu0 %2031
        %2033 = vrot.lane.b32.xlu0 %v1882, 64
        %v2034 = vpop.permute.xlu0 %2033
        %2035 = vrot.lane.b32.xlu0 %v1883, 64
        %v2036 = vpop.permute.xlu0 %2035
        %2037 = vrot.lane.b32.xlu0 %v1884, 64
        %v2038 = vpop.permute.xlu0 %2037
        %2039 = vrot.lane.b32.xlu0 %v1885, 64
        %v2040 = vpop.permute.xlu0 %2039
        %2041 = vrot.lane.b32.xlu0 %v1886, 64
        %v2042 = vpop.permute.xlu0 %2041
        %2043 = vrot.lane.b32.xlu0 %v1887, 64
        %v2044 = vpop.permute.xlu0 %2043
        %2045 = vrot.lane.b32.xlu0 %v1888, 64
        %v2046 = vpop.permute.xlu0 %2045
        %2047 = vrot.lane.b32.xlu0 %v1889, 64
        %v2048 = vpop.permute.xlu0 %2047
        %2049 = vrot.lane.b32.xlu0 %v1890, 64
        %v2050 = vpop.permute.xlu0 %2049
        %2051 = vrot.lane.b32.xlu0 %v1891, 64
        %v2052 = vpop.permute.xlu0 %2051
        %2053 = vrot.lane.b32.xlu0 %v1892, 64
        %v2054 = vpop.permute.xlu0 %2053
        %2055 = vrot.lane.b32.xlu0 %v1893, 64
        %v2056 = vpop.permute.xlu0 %2055
        %2057 = vrot.lane.b32.xlu0 %v1894, 64
        %v2058 = vpop.permute.xlu0 %2057
        %2059 = vrot.lane.b32.xlu0 %v1963, 64
        %v2060 = vpop.permute.xlu0 %2059
        %2077 = vrot.lane.b32.xlu0 %v1940, 64
        %v2078 = vpop.permute.xlu0 %2077
        %2079 = vrot.lane.b32.xlu0 %v1941, 64
        %v2080 = vpop.permute.xlu0 %2079
        %2081 = vrot.lane.b32.xlu0 %v1942, 64
        %v2082 = vpop.permute.xlu0 %2081
        %2083 = vrot.lane.b32.xlu0 %v1943, 64
        %v2084 = vpop.permute.xlu0 %2083
        %2085 = vrot.lane.b32.xlu0 %v1944, 64
        %v2086 = vpop.permute.xlu0 %2085
        %2087 = vrot.lane.b32.xlu0 %v1945, 64
        %v2088 = vpop.permute.xlu0 %2087
        %2089 = vrot.lane.b32.xlu0 %v1946, 64
        %v2090 = vpop.permute.xlu0 %2089
        %2091 = vrot.lane.b32.xlu0 %v1947, 64
        %v2092 = vpop.permute.xlu0 %2091
        %2093 = vrot.lane.b32.xlu0 %v1948, 64
        %v2094 = vpop.permute.xlu0 %2093
        %2095 = vrot.lane.b32.xlu0 %v1949, 64
        %v2096 = vpop.permute.xlu0 %2095
        %2097 = vrot.lane.b32.xlu0 %v1950, 64
        %v2098 = vpop.permute.xlu0 %2097
        %2099 = vrot.lane.b32.xlu0 %v1951, 64
        %v2100 = vpop.permute.xlu0 %2099
        %2101 = vrot.lane.b32.xlu0 %v1952, 64
        %v2102 = vpop.permute.xlu0 %2101
        %2103 = vrot.lane.b32.xlu0 %v1953, 64
        %v2104 = vpop.permute.xlu0 %2103
        %2105 = vrot.lane.b32.xlu0 %v1954, 64
        %v2106 = vpop.permute.xlu0 %2105
        %2107 = vrot.lane.b32.xlu0 %v1967, 64
        %v2108 = vpop.permute.xlu0 %2107
        %2110 = vrot.lane.b32.xlu0 %v1759, 64
        %v2111 = vpop.permute.xlu0 %2110
        %v2114 = vsel %vm720, %v1880, %v1984
        %v2118 = vsel %vm720, %v1881, %v1986
        %v2122 = vsel %vm720, %v1882, %v1988
        %v2126 = vsel %vm720, %v1883, %v1990
        %v2130 = vsel %vm720, %v1884, %v1992
        %v2134 = vsel %vm720, %v1885, %v1994
        %v2138 = vsel %vm720, %v1886, %v1996
        %v2142 = vsel %vm720, %v1887, %v1998
        %v2146 = vsel %vm720, %v1888, %v2000
        %v2150 = vsel %vm720, %v1889, %v2002
        %v2154 = vsel %vm720, %v1890, %v2004
        %v2158 = vsel %vm720, %v1891, %v2006
        %v2162 = vsel %vm720, %v1892, %v2008
        %v2166 = vsel %vm720, %v1893, %v2010
        %v2170 = vsel %vm720, %v1894, %v2012
        %v2173 = vsel %vm720, %v544, %v2030
        %v2177 = vsel %vm720, %v1940, %v2032
        %v2181 = vsel %vm720, %v1941, %v2034
        %v2185 = vsel %vm720, %v1942, %v2036
        %v2189 = vsel %vm720, %v1943, %v2038
        %v2193 = vsel %vm720, %v1944, %v2040
        %v2197 = vsel %vm720, %v1945, %v2042
        %v2201 = vsel %vm720, %v1946, %v2044
        %v2205 = vsel %vm720, %v1947, %v2046
        %v2209 = vsel %vm720, %v1948, %v2048
        %v2213 = vsel %vm720, %v1949, %v2050
        %v2217 = vsel %vm720, %v1950, %v2052
        %v2221 = vsel %vm720, %v1951, %v2054
        %v2225 = vsel %vm720, %v1952, %v2056
        %v2229 = vsel %vm720, %v1953, %v2058
        %v2233 = vsel %vm720, %v1954, %v2060
        %v2236 = vsel %vm720, %v1744, %v2078
        %v2239 = vsel %vm720, %v1745, %v2080
        %v2242 = vsel %vm720, %v1746, %v2082
        %v2245 = vsel %vm720, %v1747, %v2084
        %v2248 = vsel %vm720, %v1748, %v2086
        %v2251 = vsel %vm720, %v1749, %v2088
        %v2254 = vsel %vm720, %v1750, %v2090
        %v2257 = vsel %vm720, %v1751, %v2092
        %v2260 = vsel %vm720, %v1752, %v2094
        %v2263 = vsel %vm720, %v1753, %v2096
        %v2266 = vsel %vm720, %v1754, %v2098
        %v2269 = vsel %vm720, %v1755, %v2100
        %v2272 = vsel %vm720, %v1756, %v2102
        %v2275 = vsel %vm720, %v1757, %v2104
        %v2278 = vsel %vm720, %v1758, %v2106
        %v2281 = vsel %vm720, %v1759, %v2108
        %v2285 = vsel %vm720, %v1963, %v2111
        %v2287 = vld [vmem:[#allocation8] sm:$0xf]
        %v2288 = vld [vmem:[#allocation8 + $0x4] sm:$0xf]
        %v2289 = vld [vmem:[#allocation8 + $0x8] sm:$0xf]
        %v2290 = vld [vmem:[#allocation8 + $0xc] sm:$0xf]
        %v2291 = vld [vmem:[#allocation8 + $0x10] sm:$0xf]
        %v2292 = vld [vmem:[#allocation8 + $0x14] sm:$0xf]
        %v2293 = vld [vmem:[#allocation8 + $0x18] sm:$0xf]
        %v2294 = vld [vmem:[#allocation8 + $0x1c] sm:$0xf]
        %v2295 = vld [vmem:[#allocation8 + $0x20] sm:$0xf]
        %v2296 = vld [vmem:[#allocation8 + $0x24] sm:$0xf]
        %v2297 = vld [vmem:[#allocation8 + $0x28] sm:$0xf]
        %v2298 = vld [vmem:[#allocation8 + $0x2c] sm:$0xf]
        %v2299 = vld [vmem:[#allocation8 + $0x30] sm:$0xf]
        %v2300 = vld [vmem:[#allocation8 + $0x34] sm:$0xf]
        %v2301 = vld [vmem:[#allocation8 + $0x38] sm:$0xf]
        %v2302 = vld [vmem:[#allocation8 + $0x3c] sm:$0xf]
        %v2303 = vld [vmem:[#allocation8 + $0x40] sm:$0xf]
        %v2304 = vld [vmem:[#allocation8 + $0x44] sm:$0xf]
        %v2305 = vld [vmem:[#allocation8 + $0x48] sm:$0xf]
        %v2306 = vld [vmem:[#allocation8 + $0x4c] sm:$0xf]
        %v2307 = vld [vmem:[#allocation8 + $0x50] sm:$0xf]
        %v2308 = vld [vmem:[#allocation8 + $0x54] sm:$0xf]
        %v2309 = vld [vmem:[#allocation8 + $0x58] sm:$0xf]
        %v2310 = vld [vmem:[#allocation8 + $0x5c] sm:$0xf]
        %v2311 = vld [vmem:[#allocation8 + $0x60] sm:$0xf]
        %v2312 = vld [vmem:[#allocation8 + $0x64] sm:$0xf]
        %v2313 = vld [vmem:[#allocation8 + $0x68] sm:$0xf]
        %v2314 = vld [vmem:[#allocation8 + $0x6c] sm:$0xf]
        %v2315 = vld [vmem:[#allocation8 + $0x70] sm:$0xf]
        %v2316 = vld [vmem:[#allocation8 + $0x74] sm:$0xf]
        %v2317 = vld [vmem:[#allocation8 + $0x78] sm:$0xf]
        %v2318 = vld [vmem:[#allocation8 + $0x7c] sm:$0xf]
        %v2319 = vld [vmem:[#allocation8 + $0x80] sm:$0xf]
        %v2320 = vld [vmem:[#allocation8 + $0x84] sm:$0xf]
        %v2321 = vld [vmem:[#allocation8 + $0x88] sm:$0xf]
        %v2322 = vld [vmem:[#allocation8 + $0x8c] sm:$0xf]
        %v2323 = vld [vmem:[#allocation8 + $0x90] sm:$0xf]
        %v2324 = vld [vmem:[#allocation8 + $0x94] sm:$0xf]
        %v2325 = vld [vmem:[#allocation8 + $0x98] sm:$0xf]
        %v2326 = vld [vmem:[#allocation8 + $0x9c] sm:$0xf]
        %v2327 = vld [vmem:[#allocation8 + $0xa0] sm:$0xf]
        %v2328 = vld [vmem:[#allocation8 + $0xa4] sm:$0xf]
        %v2329 = vld [vmem:[#allocation8 + $0xa8] sm:$0xf]
        %v2330 = vld [vmem:[#allocation8 + $0xac] sm:$0xf]
        %v2331 = vld [vmem:[#allocation8 + $0xb0] sm:$0xf]
        %v2332 = vld [vmem:[#allocation8 + $0xb4] sm:$0xf]
        %v2333 = vld [vmem:[#allocation8 + $0xb8] sm:$0xf]
        %v2334 = vld [vmem:[#allocation8 + $0xbc] sm:$0xf]
        %v2335 = vld [vmem:[#allocation8 + $0xc0] sm:$0xf]
        %v2336 = vld [vmem:[#allocation8 + $0xc4] sm:$0xf]
        %v2337 = vld [vmem:[#allocation8 + $0xc8] sm:$0xf]
        %v2338 = vld [vmem:[#allocation8 + $0xcc] sm:$0xf]
        %v2339 = vld [vmem:[#allocation8 + $0xd0] sm:$0xf]
        %v2340 = vld [vmem:[#allocation8 + $0xd4] sm:$0xf]
        %v2341 = vld [vmem:[#allocation8 + $0xd8] sm:$0xf]
        %v2342 = vld [vmem:[#allocation8 + $0xdc] sm:$0xf]
        %v2343 = vld [vmem:[#allocation8 + $0xe0] sm:$0xf]
        %v2344 = vld [vmem:[#allocation8 + $0xe4] sm:$0xf]
        %v2345 = vld [vmem:[#allocation8 + $0xe8] sm:$0xf]
        %v2346 = vld [vmem:[#allocation8 + $0xec] sm:$0xf]
        %v2347 = vld [vmem:[#allocation8 + $0xf0] sm:$0xf]
        %v2348 = vld [vmem:[#allocation8 + $0xf4] sm:$0xf]
        %v2349 = vld [vmem:[#allocation8 + $0xf8] sm:$0xf]
        %v2350 = vld [vmem:[#allocation8 + $0xfc] sm:$0xf]
        %v2351 = vld [vmem:[#allocation8 + $0x100] sm:$0xf]
        %v2352 = vld [vmem:[#allocation8 + $0x104] sm:$0xf]
        %v2353 = vld [vmem:[#allocation8 + $0x108] sm:$0xf]
        %v2354 = vld [vmem:[#allocation8 + $0x10c] sm:$0xf]
        %v2355 = vld [vmem:[#allocation8 + $0x110] sm:$0xf]
        %v2356 = vld [vmem:[#allocation8 + $0x114] sm:$0xf]
        %v2357 = vld [vmem:[#allocation8 + $0x118] sm:$0xf]
        %v2358 = vld [vmem:[#allocation8 + $0x11c] sm:$0xf]
        %v2359 = vld [vmem:[#allocation10] sm:$0x1]
        %v2361 = vlaneseq
        %v2362 = vshrl.u32 %v2361, 7
        %v2363 = vsub.s32 0, %v2362
        %v2364 = vrot.slane %v2359, %v2363
        %v2438 = vunpack.c.l.b16 %v2287
        %v2439 = vunpack.c.l.b16 %v2288
        %v2440 = vunpack.c.l.b16 %v2289
        %v2441 = vunpack.c.l.b16 %v2290
        %v2442 = vunpack.c.l.b16 %v2291
        %v2443 = vunpack.c.l.b16 %v2292
        %v2444 = vunpack.c.l.b16 %v2293
        %v2445 = vunpack.c.l.b16 %v2294
        %v2446 = vunpack.c.l.b16 %v2295
        %v2447 = vunpack.c.l.b16 %v2296
        %v2448 = vunpack.c.l.b16 %v2297
        %v2449 = vunpack.c.l.b16 %v2298
        %v2450 = vunpack.c.l.b16 %v2299
        %v2451 = vunpack.c.l.b16 %v2300
        %v2452 = vunpack.c.l.b16 %v2301
        %v2453 = vunpack.c.l.b16 %v2302
        %v2454 = vunpack.c.l.b16 %v2303
        %v2455 = vunpack.c.l.b16 %v2304
        %v2456 = vunpack.c.l.b16 %v2305
        %v2457 = vunpack.c.l.b16 %v2306
        %v2458 = vunpack.c.l.b16 %v2307
        %v2459 = vunpack.c.l.b16 %v2308
        %v2460 = vunpack.c.l.b16 %v2309
        %v2461 = vunpack.c.l.b16 %v2310
        %v2462 = vunpack.c.l.b16 %v2311
        %v2463 = vunpack.c.l.b16 %v2312
        %v2464 = vunpack.c.l.b16 %v2313
        %v2465 = vunpack.c.l.b16 %v2314
        %v2466 = vunpack.c.l.b16 %v2315
        %v2467 = vunpack.c.l.b16 %v2316
        %v2468 = vunpack.c.l.b16 %v2317
        %v2469 = vunpack.c.l.b16 %v2318
        %v2470 = vunpack.c.l.b16 %v2319
        %v2471 = vunpack.c.l.b16 %v2320
        %v2472 = vunpack.c.l.b16 %v2321
        %v2473 = vunpack.c.l.b16 %v2322
        %v2474 = vunpack.c.l.b16 %v2323
        %v2475 = vunpack.c.l.b16 %v2324
        %v2476 = vunpack.c.l.b16 %v2325
        %v2477 = vunpack.c.l.b16 %v2326
        %v2478 = vunpack.c.l.b16 %v2327
        %v2479 = vunpack.c.l.b16 %v2328
        %v2480 = vunpack.c.l.b16 %v2329
        %v2481 = vunpack.c.l.b16 %v2330
        %v2482 = vunpack.c.l.b16 %v2331
        %v2483 = vunpack.c.l.b16 %v2332
        %v2484 = vunpack.c.l.b16 %v2333
        %v2485 = vunpack.c.l.b16 %v2334
        %v2486 = vunpack.c.l.b16 %v2335
        %v2487 = vunpack.c.l.b16 %v2336
        %v2488 = vunpack.c.l.b16 %v2337
        %v2489 = vunpack.c.l.b16 %v2338
        %v2490 = vunpack.c.l.b16 %v2339
        %v2491 = vunpack.c.l.b16 %v2340
        %v2492 = vunpack.c.l.b16 %v2341
        %v2493 = vunpack.c.l.b16 %v2342
        %v2494 = vunpack.c.l.b16 %v2343
        %v2495 = vunpack.c.l.b16 %v2344
        %v2496 = vunpack.c.l.b16 %v2345
        %v2497 = vunpack.c.l.b16 %v2346
        %v2498 = vunpack.c.l.b16 %v2347
        %v2499 = vunpack.c.l.b16 %v2348
        %v2500 = vunpack.c.l.b16 %v2349
        %v2501 = vunpack.c.l.b16 %v2350
        %v2502 = vunpack.c.l.b16 %v2351
        %v2503 = vunpack.c.l.b16 %v2352
        %v2504 = vunpack.c.l.b16 %v2353
        %v2505 = vunpack.c.l.b16 %v2354
        %v2506 = vunpack.c.l.b16 %v2355
        %v2507 = vunpack.c.l.b16 %v2356
        %v2508 = vunpack.c.l.b16 %v2357
        %v2509 = vunpack.c.l.b16 %v2358
        %v2510 = vpack.c.b16 %v2439, %v2438
        %v2511 = vpack.c.b16 %v2441, %v2440
        %v2512 = vpack.c.b16 %v2443, %v2442
        %v2513 = vpack.c.b16 %v2445, %v2444
        %v2514 = vpack.c.b16 %v2447, %v2446
        %v2515 = vpack.c.b16 %v2449, %v2448
        %v2516 = vpack.c.b16 %v2451, %v2450
        %v2517 = vpack.c.b16 %v2453, %v2452
        %v2518 = vpack.c.b16 %v2455, %v2454
        %v2519 = vpack.c.b16 %v2457, %v2456
        %v2520 = vpack.c.b16 %v2459, %v2458
        %v2521 = vpack.c.b16 %v2461, %v2460
        %v2522 = vpack.c.b16 %v2463, %v2462
        %v2523 = vpack.c.b16 %v2465, %v2464
        %v2524 = vpack.c.b16 %v2467, %v2466
        %v2525 = vpack.c.b16 %v2469, %v2468
        %v2526 = vpack.c.b16 %v2471, %v2470
        %v2527 = vpack.c.b16 %v2473, %v2472
        %v2528 = vpack.c.b16 %v2475, %v2474
        %v2529 = vpack.c.b16 %v2477, %v2476
        %v2530 = vpack.c.b16 %v2479, %v2478
        %v2531 = vpack.c.b16 %v2481, %v2480
        %v2532 = vpack.c.b16 %v2483, %v2482
        %v2533 = vpack.c.b16 %v2485, %v2484
        %v2534 = vpack.c.b16 %v2487, %v2486
        %v2535 = vpack.c.b16 %v2489, %v2488
        %v2536 = vpack.c.b16 %v2491, %v2490
        %v2537 = vpack.c.b16 %v2493, %v2492
        %v2538 = vpack.c.b16 %v2495, %v2494
        %v2539 = vpack.c.b16 %v2497, %v2496
        %v2540 = vpack.c.b16 %v2499, %v2498
        %v2541 = vpack.c.b16 %v2501, %v2500
        %v2542 = vpack.c.b16 %v2503, %v2502
        %v2543 = vpack.c.b16 %v2505, %v2504
        %v2544 = vpack.c.b16 %v2507, %v2506
        %v2545 = vpack.c.b16 %v2509, %v2508
        %v2582 = vsel %vm720, %v1941, 0
        %v2584 = vsel %vm720, %v1942, 0
        %v2586 = vsel %vm720, %v1943, 0
        %v2588 = vsel %vm720, %v1944, 0
        %v2590 = vsel %vm720, %v1945, 0
        %v2592 = vsel %vm720, %v1946, 0
        %v2594 = vsel %vm720, %v1947, 0
        %v2596 = vsel %vm720, %v1948, 0
        %v2598 = vsel %vm720, %v1949, 0
        %v2600 = vsel %vm720, %v1950, 0
        %v2602 = vsel %vm720, %v1951, 0
        %v2604 = vsel %vm720, %v1952, 0
        %v2606 = vsel %vm720, %v1953, 0
        %v2608 = vsel %vm720, %v1954, 0
        %v2611 = vsel %vm720, %v1967, 0
        %2613 = vmatprep.subr.bf16.mxu0 0
        %2614 = vmatpush1.bf16.msra.mxu0 %v2510
        %2615 = vmatprep.subr.bf16.mxu0 0
        %2616 = vmatpush1.bf16.msra.mxu0 %v2511
        %2617 = vmatprep.subr.bf16.mxu0 0
        %2618 = vmatpush1.bf16.msra.mxu0 %v2512
        %2619 = vmatprep.subr.bf16.mxu0 0
        %2620 = vmatpush1.bf16.msra.mxu0 %v2513
        %2621 = vmatprep.subr.bf16.mxu0 0
        %2622 = vmatpush1.bf16.msra.mxu0 %v2514
        %2623 = vmatprep.subr.bf16.mxu0 0
        %2624 = vmatpush1.bf16.msra.mxu0 %v2515
        %2625 = vmatprep.subr.bf16.mxu0 0
        %2626 = vmatpush1.bf16.msra.mxu0 %v2516
        %2627 = vmatprep.subr.bf16.mxu0 0
        %2628 = vmatpush1.bf16.msra.mxu0 %v2517
        %2629 = vmatprep.subr.bf16.mxu0 0
        %2630 = vmatpush1.bf16.msra.mxu0 %v2518
        %2631 = vmatprep.subr.bf16.mxu0 0
        %2632 = vmatpush1.bf16.msra.mxu0 %v2519
        %2633 = vmatprep.subr.bf16.mxu0 0
        %2634 = vmatpush1.bf16.msra.mxu0 %v2520
        %2635 = vmatprep.subr.bf16.mxu0 0
        %2636 = vmatpush1.bf16.msra.mxu0 %v2521
        %2637 = vmatprep.subr.bf16.mxu0 0
        %2638 = vmatpush1.bf16.msra.mxu0 %v2522
        %2639 = vmatprep.subr.bf16.mxu0 0
        %2640 = vmatpush1.bf16.msra.mxu0 %v2523
        %2641 = vmatprep.subr.bf16.mxu0 0
        %2642 = vmatpush1.bf16.msra.mxu0 %v2524
        %2643 = vmatprep.subr.bf16.mxu0 0
        %2644 = vmatpush1.bf16.msra.mxu0 %v2525
        %2645 = vmatprep.mubr.bf16.mxu0 %v2173
        %2646 = vmatmul.mubr.bf16.gmra.mrb[0].mxu0 %v723
        %v2647 = vpop.f32.mrb[0].mxu0
        %v2648 = vadd.f32 %v2364, %v2647
        %v2649 = vpop.f32.mrb[0].mxu0
        %v2650 = vpop.f32.mrb[0].mxu0
        %v2651 = vadd.f32 %v2364, %v2650
        %v2652 = vpop.f32.mrb[0].mxu0
        %2653 = vmatprep.mubr.bf16.mxu0 %v2177
        %2654 = vmatmul.mubr.bf16.gmra.mrb[0].mxu0 %v2114
        %v2655 = vpop.f32.mrb[0].mxu0
        %v2656 = vadd.f32 %v2364, %v2655
        %v2657 = vpop.f32.mrb[0].mxu0
        %v2658 = vpop.f32.mrb[0].mxu0
        %v2659 = vadd.f32 %v2364, %v2658
        %v2660 = vpop.f32.mrb[0].mxu0
        %2661 = vmatprep.mubr.bf16.mxu0 %v2181
        %2662 = vmatmul.mubr.bf16.gmra.mrb[0].mxu0 %v2118
        %v2663 = vpop.f32.mrb[0].mxu0
        %v2664 = vadd.f32 %v2364, %v2663
        %v2665 = vpop.f32.mrb[0].mxu0
        %v2666 = vpop.f32.mrb[0].mxu0
        %v2667 = vadd.f32 %v2364, %v2666
        %v2668 = vpop.f32.mrb[0].mxu0
        %2669 = vmatprep.mubr.bf16.mxu0 %v2185
        %2670 = vmatmul.mubr.bf16.gmra.mrb[0].mxu0 %v2122
        %v2671 = vpop.f32.mrb[0].mxu0
        %v2672 = vadd.f32 %v2364, %v2671
        %v2673 = vpop.f32.mrb[0].mxu0
        %v2674 = vpop.f32.mrb[0].mxu0
        %v2675 = vadd.f32 %v2364, %v2674
        %v2676 = vpop.f32.mrb[0].mxu0
        %2677 = vmatprep.mubr.bf16.mxu0 %v2189
        %2678 = vmatmul.mubr.bf16.gmra.mrb[0].mxu0 %v2126
        %v2679 = vpop.f32.mrb[0].mxu0
        %v2680 = vadd.f32 %v2364, %v2679
        %v2681 = vpop.f32.mrb[0].mxu0
        %v2682 = vpop.f32.mrb[0].mxu0
        %v2683 = vadd.f32 %v2364, %v2682
        %v2684 = vpop.f32.mrb[0].mxu0
        %2685 = vmatprep.mubr.bf16.mxu0 %v2193
        %2686 = vmatmul.mubr.bf16.gmra.mrb[0].mxu0 %v2130
        %v2687 = vpop.f32.mrb[0].mxu0
        %v2688 = vadd.f32 %v2364, %v2687
        %v2689 = vpop.f32.mrb[0].mxu0
        %v2690 = vpop.f32.mrb[0].mxu0
        %v2691 = vadd.f32 %v2364, %v2690
        %v2692 = vpop.f32.mrb[0].mxu0
        %2693 = vmatprep.mubr.bf16.mxu0 %v2197
        %2694 = vmatmul.mubr.bf16.gmra.mrb[0].mxu0 %v2134
        %v2695 = vpop.f32.mrb[0].mxu0
        %v2696 = vadd.f32 %v2364, %v2695
        %v2697 = vpop.f32.mrb[0].mxu0
        %v2698 = vpop.f32.mrb[0].mxu0
        %v2699 = vadd.f32 %v2364, %v2698
        %v2700 = vpop.f32.mrb[0].mxu0
        %2701 = vmatprep.mubr.bf16.mxu0 %v2201
        %2702 = vmatmul.mubr.bf16.gmra.mrb[0].mxu0 %v2138
        %v2703 = vpop.f32.mrb[0].mxu0
        %v2704 = vadd.f32 %v2364, %v2703
        %v2705 = vpop.f32.mrb[0].mxu0
        %v2706 = vpop.f32.mrb[0].mxu0
        %v2707 = vadd.f32 %v2364, %v2706
        %v2708 = vpop.f32.mrb[0].mxu0
        %2709 = vmatprep.mubr.bf16.mxu0 %v2205
        %2710 = vmatmul.mubr.bf16.gmra.mrb[0].mxu0 %v2142
        %v2711 = vpop.f32.mrb[0].mxu0
        %v2712 = vadd.f32 %v2364, %v2711
        %v2713 = vpop.f32.mrb[0].mxu0
        %v2714 = vpop.f32.mrb[0].mxu0
        %v2715 = vadd.f32 %v2364, %v2714
        %v2716 = vpop.f32.mrb[0].mxu0
        %2717 = vmatprep.mubr.bf16.mxu0 %v2209
        %2718 = vmatmul.mubr.bf16.gmra.mrb[0].mxu0 %v2146
        %v2719 = vpop.f32.mrb[0].mxu0
        %v2720 = vadd.f32 %v2364, %v2719
        %v2721 = vpop.f32.mrb[0].mxu0
        %v2722 = vpop.f32.mrb[0].mxu0
        %v2723 = vadd.f32 %v2364, %v2722
        %v2724 = vpop.f32.mrb[0].mxu0
        %2725 = vmatprep.mubr.bf16.mxu0 %v2213
        %2726 = vmatmul.mubr.bf16.gmra.mrb[0].mxu0 %v2150
        %v2727 = vpop.f32.mrb[0].mxu0
        %v2728 = vadd.f32 %v2364, %v2727
        %v2729 = vpop.f32.mrb[0].mxu0
        %v2730 = vpop.f32.mrb[0].mxu0
        %v2731 = vadd.f32 %v2364, %v2730
        %v2732 = vpop.f32.mrb[0].mxu0
        %2733 = vmatprep.mubr.bf16.mxu0 %v2217
        %2734 = vmatmul.mubr.bf16.gmra.mrb[0].mxu0 %v2154
        %v2735 = vpop.f32.mrb[0].mxu0
        %v2736 = vadd.f32 %v2364, %v2735
        %v2737 = vpop.f32.mrb[0].mxu0
        %v2738 = vpop.f32.mrb[0].mxu0
        %v2739 = vadd.f32 %v2364, %v2738
        %v2740 = vpop.f32.mrb[0].mxu0
        %2741 = vmatprep.mubr.bf16.mxu0 %v2221
        %2742 = vmatmul.mubr.bf16.gmra.mrb[0].mxu0 %v2158
        %v2743 = vpop.f32.mrb[0].mxu0
        %v2744 = vadd.f32 %v2364, %v2743
        %v2745 = vpop.f32.mrb[0].mxu0
        %v2746 = vpop.f32.mrb[0].mxu0
        %v2747 = vadd.f32 %v2364, %v2746
        %v2748 = vpop.f32.mrb[0].mxu0
        %2749 = vmatprep.mubr.bf16.mxu0 %v2225
        %2750 = vmatmul.mubr.bf16.gmra.mrb[0].mxu0 %v2162
        %v2751 = vpop.f32.mrb[0].mxu0
        %v2752 = vadd.f32 %v2364, %v2751
        %v2753 = vpop.f32.mrb[0].mxu0
        %v2754 = vpop.f32.mrb[0].mxu0
        %v2755 = vadd.f32 %v2364, %v2754
        %v2756 = vpop.f32.mrb[0].mxu0
        %2757 = vmatprep.mubr.bf16.mxu0 %v2229
        %2758 = vmatmul.mubr.bf16.gmra.mrb[0].mxu0 %v2166
        %v2759 = vpop.f32.mrb[0].mxu0
        %v2760 = vadd.f32 %v2364, %v2759
        %v2761 = vpop.f32.mrb[0].mxu0
        %v2762 = vpop.f32.mrb[0].mxu0
        %v2763 = vadd.f32 %v2364, %v2762
        %v2764 = vpop.f32.mrb[0].mxu0
        %2765 = vmatprep.mubr.bf16.mxu0 %v2233
        %2766 = vmatmul.mubr.bf16.gmra.mrb[0].mxu0 %v2170
        %v2767 = vpop.f32.mrb[0].mxu0
        %v2768 = vadd.f32 %v2364, %v2767
        %v2769 = vpop.f32.mrb[0].mxu0
        %v2770 = vpop.f32.mrb[0].mxu0
        %v2771 = vadd.f32 %v2364, %v2770
        %v2772 = vpop.f32.mrb[0].mxu0
        %2773 = vdwg.mxu0
        %2774 = vmatprep.subr.bf16.mxu0 0
        %2775 = vmatpush1.bf16.msra.mxu0 %v2526
        %2776 = vmatprep.subr.bf16.mxu0 0
        %2777 = vmatpush1.bf16.msra.mxu0 %v2527
        %2778 = vmatprep.subr.bf16.mxu0 0
        %2779 = vmatpush1.bf16.msra.mxu0 %v2528
        %2780 = vmatprep.subr.bf16.mxu0 0
        %2781 = vmatpush1.bf16.msra.mxu0 %v2529
        %2782 = vmatprep.subr.bf16.mxu0 0
        %2783 = vmatpush1.bf16.msra.mxu0 %v2530
        %2784 = vmatprep.subr.bf16.mxu0 0
        %2785 = vmatpush1.bf16.msra.mxu0 %v2531
        %2786 = vmatprep.subr.bf16.mxu0 0
        %2787 = vmatpush1.bf16.msra.mxu0 %v2532
        %2788 = vmatprep.subr.bf16.mxu0 0
        %2789 = vmatpush1.bf16.msra.mxu0 %v2533
        %2790 = vmatprep.subr.bf16.mxu0 0
        %2791 = vmatpush1.bf16.msra.mxu0 %v2534
        %2792 = vmatprep.subr.bf16.mxu0 0
        %2793 = vmatpush1.bf16.msra.mxu0 %v2535
        %2794 = vmatprep.subr.bf16.mxu0 0
        %2795 = vmatpush1.bf16.msra.mxu0 %v2536
        %2796 = vmatprep.subr.bf16.mxu0 0
        %2797 = vmatpush1.bf16.msra.mxu0 %v2537
        %2798 = vmatprep.subr.bf16.mxu0 0
        %2799 = vmatpush1.bf16.msra.mxu0 %v2538
        %2800 = vmatprep.subr.bf16.mxu0 0
        %2801 = vmatpush1.bf16.msra.mxu0 %v2539
        %2802 = vmatprep.subr.bf16.mxu0 0
        %2803 = vmatpush1.bf16.msra.mxu0 %v2540
        %2804 = vmatprep.subr.bf16.mxu0 0
        %2805 = vmatpush1.bf16.msra.mxu0 %v2541
        %2806 = vmatprep.mubr.bf16.mxu0 %v2118
        %2807 = vmatmul.mubr.bf16.gmra.mrb[0].mxu0 %v2236
        %v2808 = vpop.f32.mrb[0].mxu0
        %v2809 = vadd.f32 %v2648, %v2808
        %v2810 = vpop.f32.mrb[0].mxu0
        %v2811 = vpop.f32.mrb[0].mxu0
        %v2812 = vadd.f32 %v2651, %v2811
        %v2813 = vpop.f32.mrb[0].mxu0
        %2814 = vmatprep.mubr.bf16.mxu0 %v2122
        %2815 = vmatmul.mubr.bf16.gmra.mrb[0].mxu0 %v2239
        %v2816 = vpop.f32.mrb[0].mxu0
        %v2817 = vadd.f32 %v2656, %v2816
        %v2818 = vpop.f32.mrb[0].mxu0
        %v2819 = vpop.f32.mrb[0].mxu0
        %v2820 = vadd.f32 %v2659, %v2819
        %v2821 = vpop.f32.mrb[0].mxu0
        %2822 = vmatprep.mubr.bf16.mxu0 %v2126
        %2823 = vmatmul.mubr.bf16.gmra.mrb[0].mxu0 %v2242
        %v2824 = vpop.f32.mrb[0].mxu0
        %v2825 = vadd.f32 %v2664, %v2824
        %v2826 = vpop.f32.mrb[0].mxu0
        %v2827 = vpop.f32.mrb[0].mxu0
        %v2828 = vadd.f32 %v2667, %v2827
        %v2829 = vpop.f32.mrb[0].mxu0
        %2830 = vmatprep.mubr.bf16.mxu0 %v2130
        %2831 = vmatmul.mubr.bf16.gmra.mrb[0].mxu0 %v2245
        %v2832 = vpop.f32.mrb[0].mxu0
        %v2833 = vadd.f32 %v2672, %v2832
        %v2834 = vpop.f32.mrb[0].mxu0
        %v2835 = vpop.f32.mrb[0].mxu0
        %v2836 = vadd.f32 %v2675, %v2835
        %v2837 = vpop.f32.mrb[0].mxu0
        %2838 = vmatprep.mubr.bf16.mxu0 %v2134
        %2839 = vmatmul.mubr.bf16.gmra.mrb[0].mxu0 %v2248
        %v2840 = vpop.f32.mrb[0].mxu0
        %v2841 = vadd.f32 %v2680, %v2840
        %v2842 = vpop.f32.mrb[0].mxu0
        %v2843 = vpop.f32.mrb[0].mxu0
        %v2844 = vadd.f32 %v2683, %v2843
        %v2845 = vpop.f32.mrb[0].mxu0
        %2846 = vmatprep.mubr.bf16.mxu0 %v2138
        %2847 = vmatmul.mubr.bf16.gmra.mrb[0].mxu0 %v2251
        %v2848 = vpop.f32.mrb[0].mxu0
        %v2849 = vadd.f32 %v2688, %v2848
        %v2850 = vpop.f32.mrb[0].mxu0
        %v2851 = vpop.f32.mrb[0].mxu0
        %v2852 = vadd.f32 %v2691, %v2851
        %v2853 = vpop.f32.mrb[0].mxu0
        %2854 = vmatprep.mubr.bf16.mxu0 %v2142
        %2855 = vmatmul.mubr.bf16.gmra.mrb[0].mxu0 %v2254
        %v2856 = vpop.f32.mrb[0].mxu0
        %v2857 = vadd.f32 %v2696, %v2856
        %v2858 = vpop.f32.mrb[0].mxu0
        %v2859 = vpop.f32.mrb[0].mxu0
        %v2860 = vadd.f32 %v2699, %v2859
        %v2861 = vpop.f32.mrb[0].mxu0
        %2862 = vmatprep.mubr.bf16.mxu0 %v2146
        %2863 = vmatmul.mubr.bf16.gmra.mrb[0].mxu0 %v2257
        %v2864 = vpop.f32.mrb[0].mxu0
        %v2865 = vadd.f32 %v2704, %v2864
        %v2866 = vpop.f32.mrb[0].mxu0
        %v2867 = vpop.f32.mrb[0].mxu0
        %v2868 = vadd.f32 %v2707, %v2867
        %v2869 = vpop.f32.mrb[0].mxu0
        %2870 = vmatprep.mubr.bf16.mxu0 %v2150
        %2871 = vmatmul.mubr.bf16.gmra.mrb[0].mxu0 %v2260
        %v2872 = vpop.f32.mrb[0].mxu0
        %v2873 = vadd.f32 %v2712, %v2872
        %v2874 = vpop.f32.mrb[0].mxu0
        %v2875 = vpop.f32.mrb[0].mxu0
        %v2876 = vadd.f32 %v2715, %v2875
        %v2877 = vpop.f32.mrb[0].mxu0
        %2878 = vmatprep.mubr.bf16.mxu0 %v2154
        %2879 = vmatmul.mubr.bf16.gmra.mrb[0].mxu0 %v2263
        %v2880 = vpop.f32.mrb[0].mxu0
        %v2881 = vadd.f32 %v2720, %v2880
        %v2882 = vpop.f32.mrb[0].mxu0
        %v2883 = vpop.f32.mrb[0].mxu0
        %v2884 = vadd.f32 %v2723, %v2883
        %v2885 = vpop.f32.mrb[0].mxu0
        %2886 = vmatprep.mubr.bf16.mxu0 %v2158
        %2887 = vmatmul.mubr.bf16.gmra.mrb[0].mxu0 %v2266
        %v2888 = vpop.f32.mrb[0].mxu0
        %v2889 = vadd.f32 %v2728, %v2888
        %v2890 = vpop.f32.mrb[0].mxu0
        %v2891 = vpop.f32.mrb[0].mxu0
        %v2892 = vadd.f32 %v2731, %v2891
        %v2893 = vpop.f32.mrb[0].mxu0
        %2894 = vmatprep.mubr.bf16.mxu0 %v2162
        %2895 = vmatmul.mubr.bf16.gmra.mrb[0].mxu0 %v2269
        %v2896 = vpop.f32.mrb[0].mxu0
        %v2897 = vadd.f32 %v2736, %v2896
        %v2898 = vpop.f32.mrb[0].mxu0
        %v2899 = vpop.f32.mrb[0].mxu0
        %v2900 = vadd.f32 %v2739, %v2899
        %v2901 = vpop.f32.mrb[0].mxu0
        %2902 = vmatprep.mubr.bf16.mxu0 %v2166
        %2903 = vmatmul.mubr.bf16.gmra.mrb[0].mxu0 %v2272
        %v2904 = vpop.f32.mrb[0].mxu0
        %v2905 = vadd.f32 %v2744, %v2904
        %v2906 = vpop.f32.mrb[0].mxu0
        %v2907 = vpop.f32.mrb[0].mxu0
        %v2908 = vadd.f32 %v2747, %v2907
        %v2909 = vpop.f32.mrb[0].mxu0
        %2910 = vmatprep.mubr.bf16.mxu0 %v2170
        %2911 = vmatmul.mubr.bf16.gmra.mrb[0].mxu0 %v2275
        %v2912 = vpop.f32.mrb[0].mxu0
        %v2913 = vadd.f32 %v2752, %v2912
        %v2914 = vpop.f32.mrb[0].mxu0
        %v2915 = vpop.f32.mrb[0].mxu0
        %v2916 = vadd.f32 %v2755, %v2915
        %v2917 = vpop.f32.mrb[0].mxu0
        %2918 = vmatprep.mubr.bf16.mxu0 %v2285
        %2919 = vmatmul.mubr.bf16.gmra.mrb[0].mxu0 %v2278
        %v2920 = vpop.f32.mrb[0].mxu0
        %v2921 = vadd.f32 %v2760, %v2920
        %v2922 = vpop.f32.mrb[0].mxu0
        %v2923 = vpop.f32.mrb[0].mxu0
        %v2924 = vadd.f32 %v2763, %v2923
        %v2925 = vpop.f32.mrb[0].mxu0
        %2926 = vmatprep.mubr.bf16.mxu0 %v723
        %2927 = vmatmul.mubr.bf16.gmra.mrb[0].mxu0 %v2281
        %v2928 = vpop.f32.mrb[0].mxu0
        %v2929 = vadd.f32 %v2768, %v2928
        %v2930 = vpop.f32.mrb[0].mxu0
        %v2931 = vpop.f32.mrb[0].mxu0
        %v2932 = vadd.f32 %v2771, %v2931
        %v2933 = vpop.f32.mrb[0].mxu0
        %2934 = vdwg.mxu0
        %2935 = vmatprep.subr.bf16.mxu0 0
        %2936 = vmatpush1.bf16.msra.mxu0 %v2542
        %2937 = vmatprep.subr.bf16.mxu0 0
        %2938 = vmatpush1.bf16.msra.mxu0 %v2543
        %2939 = vmatprep.subr.bf16.mxu0 0
        %2940 = vmatpush1.bf16.msra.mxu0 %v2544
        %2941 = vmatprep.subr.bf16.mxu0 0
        %2942 = vmatpush1.bf16.msra.mxu0 %v2545
        %2943 = vmatprep.subr.bf16.mxu0 0
        %2944 = vmatpush1.bf16.msra.mxu0 0
        %2945 = vmatprep.subr.bf16.mxu0 0
        %2946 = vmatpush1.bf16.msra.mxu0 0
        %2947 = vmatprep.subr.bf16.mxu0 0
        %2948 = vmatpush1.bf16.msra.mxu0 0
        %2949 = vmatprep.subr.bf16.mxu0 0
        %2950 = vmatpush1.bf16.msra.mxu0 0
        %2951 = vmatprep.subr.bf16.mxu0 0
        %2952 = vmatpush1.bf16.msra.mxu0 0
        %2953 = vmatprep.subr.bf16.mxu0 0
        %2954 = vmatpush1.bf16.msra.mxu0 0
        %2955 = vmatprep.subr.bf16.mxu0 0
        %2956 = vmatpush1.bf16.msra.mxu0 0
        %2957 = vmatprep.subr.bf16.mxu0 0
        %2958 = vmatpush1.bf16.msra.mxu0 0
        %2959 = vmatprep.subr.bf16.mxu0 0
        %2960 = vmatpush1.bf16.msra.mxu0 0
        %2961 = vmatprep.subr.bf16.mxu0 0
        %2962 = vmatpush1.bf16.msra.mxu0 0
        %2963 = vmatprep.subr.bf16.mxu0 0
        %2964 = vmatpush1.bf16.msra.mxu0 0
        %2965 = vmatprep.subr.bf16.mxu0 0
        %2966 = vmatpush1.bf16.msra.mxu0 0
        %2967 = vmatprep.mubr.bf16.mxu0 0
        %2968 = vmatmul.mubr.bf16.gmra.mrb[0].mxu0 %v2582
        %v2969 = vpop.f32.mrb[0].mxu0
        %v2970 = vadd.f32 %v2809, %v2969
        %v2971 = vpop.f32.mrb[0].mxu0
        %v2972 = vpop.f32.mrb[0].mxu0
        %v2973 = vadd.f32 %v2812, %v2972
        %v2974 = vpop.f32.mrb[0].mxu0
        %2975 = vmatprep.mubr.bf16.mxu0 0
        %2976 = vmatmul.mubr.bf16.gmra.mrb[0].mxu0 %v2584
        %v2977 = vpop.f32.mrb[0].mxu0
        %v2978 = vadd.f32 %v2817, %v2977
        %v2979 = vpop.f32.mrb[0].mxu0
        %v2980 = vpop.f32.mrb[0].mxu0
        %v2981 = vadd.f32 %v2820, %v2980
        %v2982 = vpop.f32.mrb[0].mxu0
        %2983 = vmatprep.mubr.bf16.mxu0 0
        %2984 = vmatmul.mubr.bf16.gmra.mrb[0].mxu0 %v2586
        %v2985 = vpop.f32.mrb[0].mxu0
        %v2986 = vadd.f32 %v2825, %v2985
        %v2987 = vpop.f32.mrb[0].mxu0
        %v2988 = vpop.f32.mrb[0].mxu0
        %v2989 = vadd.f32 %v2828, %v2988
        %v2990 = vpop.f32.mrb[0].mxu0
        %2991 = vmatprep.mubr.bf16.mxu0 0
        %2992 = vmatmul.mubr.bf16.gmra.mrb[0].mxu0 %v2588
        %v2993 = vpop.f32.mrb[0].mxu0
        %v2994 = vadd.f32 %v2833, %v2993
        %v2995 = vpop.f32.mrb[0].mxu0
        %v2996 = vpop.f32.mrb[0].mxu0
        %v2997 = vadd.f32 %v2836, %v2996
        %v2998 = vpop.f32.mrb[0].mxu0
        %2999 = vmatprep.mubr.bf16.mxu0 0
        %3000 = vmatmul.mubr.bf16.gmra.mrb[0].mxu0 %v2590
        %v3001 = vpop.f32.mrb[0].mxu0
        %v3002 = vadd.f32 %v2841, %v3001
        %v3003 = vpop.f32.mrb[0].mxu0
        %v3004 = vpop.f32.mrb[0].mxu0
        %v3005 = vadd.f32 %v2844, %v3004
        %v3006 = vpop.f32.mrb[0].mxu0
        %3007 = vmatprep.mubr.bf16.mxu0 0
        %3008 = vmatmul.mubr.bf16.gmra.mrb[0].mxu0 %v2592
        %v3009 = vpop.f32.mrb[0].mxu0
        %v3010 = vadd.f32 %v2849, %v3009
        %v3011 = vpop.f32.mrb[0].mxu0
        %v3012 = vpop.f32.mrb[0].mxu0
        %v3013 = vadd.f32 %v2852, %v3012
        %v3014 = vpop.f32.mrb[0].mxu0
        %3015 = vmatprep.mubr.bf16.mxu0 0
        %3016 = vmatmul.mubr.bf16.gmra.mrb[0].mxu0 %v2594
        %v3017 = vpop.f32.mrb[0].mxu0
        %v3018 = vadd.f32 %v2857, %v3017
        %v3019 = vpop.f32.mrb[0].mxu0
        %v3020 = vpop.f32.mrb[0].mxu0
        %v3021 = vadd.f32 %v2860, %v3020
        %v3022 = vpop.f32.mrb[0].mxu0
        %3023 = vmatprep.mubr.bf16.mxu0 0
        %3024 = vmatmul.mubr.bf16.gmra.mrb[0].mxu0 %v2596
        %v3025 = vpop.f32.mrb[0].mxu0
        %v3026 = vadd.f32 %v2865, %v3025
        %v3027 = vpop.f32.mrb[0].mxu0
        %v3028 = vpop.f32.mrb[0].mxu0
        %v3029 = vadd.f32 %v2868, %v3028
        %v3030 = vpop.f32.mrb[0].mxu0
        %3031 = vmatprep.mubr.bf16.mxu0 0
        %3032 = vmatmul.mubr.bf16.gmra.mrb[0].mxu0 %v2598
        %v3033 = vpop.f32.mrb[0].mxu0
        %v3034 = vadd.f32 %v2873, %v3033
        %v3035 = vpop.f32.mrb[0].mxu0
        %v3036 = vpop.f32.mrb[0].mxu0
        %v3037 = vadd.f32 %v2876, %v3036
        %v3038 = vpop.f32.mrb[0].mxu0
        %3039 = vmatprep.mubr.bf16.mxu0 0
        %3040 = vmatmul.mubr.bf16.gmra.mrb[0].mxu0 %v2600
        %v3041 = vpop.f32.mrb[0].mxu0
        %v3042 = vadd.f32 %v2881, %v3041
        %v3043 = vpop.f32.mrb[0].mxu0
        %v3044 = vpop.f32.mrb[0].mxu0
        %v3045 = vadd.f32 %v2884, %v3044
        %v3046 = vpop.f32.mrb[0].mxu0
        %3047 = vmatprep.mubr.bf16.mxu0 0
        %3048 = vmatmul.mubr.bf16.gmra.mrb[0].mxu0 %v2602
        %v3049 = vpop.f32.mrb[0].mxu0
        %v3050 = vadd.f32 %v2889, %v3049
        %v3051 = vpop.f32.mrb[0].mxu0
        %v3052 = vpop.f32.mrb[0].mxu0
        %v3053 = vadd.f32 %v2892, %v3052
        %v3054 = vpop.f32.mrb[0].mxu0
        %3055 = vmatprep.mubr.bf16.mxu0 0
        %3056 = vmatmul.mubr.bf16.gmra.mrb[0].mxu0 %v2604
        %v3057 = vpop.f32.mrb[0].mxu0
        %v3058 = vadd.f32 %v2897, %v3057
        %v3059 = vpop.f32.mrb[0].mxu0
        %v3060 = vpop.f32.mrb[0].mxu0
        %v3061 = vadd.f32 %v2900, %v3060
        %v3062 = vpop.f32.mrb[0].mxu0
        %3063 = vmatprep.mubr.bf16.mxu0 0
        %3064 = vmatmul.mubr.bf16.gmra.mrb[0].mxu0 %v2606
        %v3065 = vpop.f32.mrb[0].mxu0
        %v3066 = vadd.f32 %v2905, %v3065
        %v3067 = vpop.f32.mrb[0].mxu0
        %v3068 = vpop.f32.mrb[0].mxu0
        %v3069 = vadd.f32 %v2908, %v3068
        %v3070 = vpop.f32.mrb[0].mxu0
        %3071 = vmatprep.mubr.bf16.mxu0 0
        %3072 = vmatmul.mubr.bf16.gmra.mrb[0].mxu0 %v2608
        %v3073 = vpop.f32.mrb[0].mxu0
        %v3074 = vadd.f32 %v2913, %v3073
        %v3075 = vpop.f32.mrb[0].mxu0
        %v3076 = vpop.f32.mrb[0].mxu0
        %v3077 = vadd.f32 %v2916, %v3076
        %v3078 = vpop.f32.mrb[0].mxu0
        %3079 = vmatprep.mubr.bf16.mxu0 0
        %3080 = vmatmul.mubr.bf16.gmra.mrb[0].mxu0 %v2611
        %v3081 = vpop.f32.mrb[0].mxu0
        %v3082 = vadd.f32 %v2921, %v3081
        %v3083 = vpop.f32.mrb[0].mxu0
        %v3084 = vpop.f32.mrb[0].mxu0
        %v3085 = vadd.f32 %v2924, %v3084
        %v3086 = vpop.f32.mrb[0].mxu0
        %3087 = vmatprep.mubr.bf16.mxu0 0
        %3088 = vmatmul.mubr.bf16.gmra.mrb[0].mxu0 %v1227
        %v3089 = vpop.f32.mrb[0].mxu0
        %v3090 = vadd.f32 %v2929, %v3089
        %v3091 = vpop.f32.mrb[0].mxu0
        %v3092 = vpop.f32.mrb[0].mxu0
        %v3093 = vadd.f32 %v2932, %v3092
        %v3094 = vpop.f32.mrb[0].mxu0
        %3095 = vdwg.mxu0
        %v3096 = vadd.f32 %v298, %v2970
        %v3097 = vadd.f32 %v299, %v2973
        %v3098 = vadd.f32 %v300, %v2978
        %v3099 = vadd.f32 %v301, %v2981
        %v3100 = vadd.f32 %v302, %v2986
        %v3101 = vadd.f32 %v303, %v2989
        %v3102 = vadd.f32 %v304, %v2994
        %v3103 = vadd.f32 %v305, %v2997
        %v3104 = vadd.f32 %v306, %v3002
        %v3105 = vadd.f32 %v307, %v3005
        %v3106 = vadd.f32 %v308, %v3010
        %v3107 = vadd.f32 %v309, %v3013
        %v3108 = vadd.f32 %v310, %v3018
        %v3109 = vadd.f32 %v311, %v3021
        %v3110 = vadd.f32 %v312, %v3026
        %v3111 = vadd.f32 %v313, %v3029
        %v3112 = vadd.f32 %v314, %v3034
        %v3113 = vadd.f32 %v315, %v3037
        %v3114 = vadd.f32 %v316, %v3042
        %v3115 = vadd.f32 %v317, %v3045
        %v3116 = vadd.f32 %v318, %v3050
        %v3117 = vadd.f32 %v319, %v3053
        %v3118 = vadd.f32 %v320, %v3058
        %v3119 = vadd.f32 %v321, %v3061
        %v3120 = vadd.f32 %v322, %v3066
        %v3121 = vadd.f32 %v323, %v3069
        %v3122 = vadd.f32 %v324, %v3074
        %v3123 = vadd.f32 %v325, %v3077
        %v3124 = vadd.f32 %v326, %v3082
        %v3125 = vadd.f32 %v327, %v3085
        %v3126 = vadd.f32 %v328, %v3090
        %v3127 = vadd.f32 %v329, %v3093
        %3128 = vst.msk [vmem:[%s296] sm:$0xff] %vm720, %v3096
        %3129 = vst.msk [vmem:[%s296 + $0x8] sm:$0xff] %vm720, %v3097
        %3130 = vst.msk [vmem:[%s296 + $0x10] sm:$0xff] %vm720, %v3098
        %3131 = vst.msk [vmem:[%s296 + $0x18] sm:$0xff] %vm720, %v3099
        %3132 = vst.msk [vmem:[%s296 + $0x20] sm:$0xff] %vm720, %v3100
        %3133 = vst.msk [vmem:[%s296 + $0x28] sm:$0xff] %vm720, %v3101
        %3134 = vst.msk [vmem:[%s296 + $0x30] sm:$0xff] %vm720, %v3102
        %3135 = vst.msk [vmem:[%s296 + $0x38] sm:$0xff] %vm720, %v3103
        %3136 = vst.msk [vmem:[%s296 + $0x40] sm:$0xff] %vm720, %v3104
        %3137 = vst.msk [vmem:[%s296 + $0x48] sm:$0xff] %vm720, %v3105
        %3138 = vst.msk [vmem:[%s296 + $0x50] sm:$0xff] %vm720, %v3106
        %3139 = vst.msk [vmem:[%s296 + $0x58] sm:$0xff] %vm720, %v3107
        %3140 = vst.msk [vmem:[%s296 + $0x60] sm:$0xff] %vm720, %v3108
        %3141 = vst.msk [vmem:[%s296 + $0x68] sm:$0xff] %vm720, %v3109
        %3142 = vst.msk [vmem:[%s296 + $0x70] sm:$0xff] %vm720, %v3110
        %3143 = vst.msk [vmem:[%s296 + $0x78] sm:$0xff] %vm720, %v3111
        %3144 = vst.msk [vmem:[%s296 + $0x80] sm:$0xff] %vm720, %v3112
        %3145 = vst.msk [vmem:[%s296 + $0x88] sm:$0xff] %vm720, %v3113
        %3146 = vst.msk [vmem:[%s296 + $0x90] sm:$0xff] %vm720, %v3114
        %3147 = vst.msk [vmem:[%s296 + $0x98] sm:$0xff] %vm720, %v3115
        %3148 = vst.msk [vmem:[%s296 + $0xa0] sm:$0xff] %vm720, %v3116
        %3149 = vst.msk [vmem:[%s296 + $0xa8] sm:$0xff] %vm720, %v3117
        %3150 = vst.msk [vmem:[%s296 + $0xb0] sm:$0xff] %vm720, %v3118
        %3151 = vst.msk [vmem:[%s296 + $0xb8] sm:$0xff] %vm720, %v3119
        %3152 = vst.msk [vmem:[%s296 + $0xc0] sm:$0xff] %vm720, %v3120
        %3153 = vst.msk [vmem:[%s296 + $0xc8] sm:$0xff] %vm720, %v3121
        %3154 = vst.msk [vmem:[%s296 + $0xd0] sm:$0xff] %vm720, %v3122
        %3155 = vst.msk [vmem:[%s296 + $0xd8] sm:$0xff] %vm720, %v3123
        %3156 = vst.msk [vmem:[%s296 + $0xe0] sm:$0xff] %vm720, %v3124
        %3157 = vst.msk [vmem:[%s296 + $0xe8] sm:$0xff] %vm720, %v3125
        %3158 = vst.msk [vmem:[%s296 + $0xf0] sm:$0xff] %vm720, %v3126
        %3159 = vst.msk [vmem:[%s296 + $0xf8] sm:$0xff] %vm720, %v3127
        %s3160 = sand.u32 %s142, 1
        %s3161 = scalar_lea.sflag [#allocation4], %s3160
        %s3162 = sand.u32 %s142, 1
        %s3163 = smul.addr %s3162, 256
        %s3164 = scalar_lea.vmem [#allocation11], %s3163
        // Predicated region
        $region61: #{tpu_custom_call.1} parent=39 // pred_check
          %p3165 = pneg %p152
        $region62: #{tpu_custom_call.1} parent=39 // pred_check_branch
          %3167 = sbr.rel (%p3165) target = $region64
        $region63: #{tpu_custom_call.1} parent=39 // pred_region
          %s3169 = ssub.s32 4096, 4096
          %3170 = vsyncadd %s3161, %s3169
          %s3171 = smul.addr %s24, 32
          %s3172 = smul.addr %s3171, 128
          %s3173 = scalar_lea.hbm %s5, %s3172
          %s3174 = sshll.u32 %s3164, 4
          %s3175 = int_to_ptr.vmem [resolvable:$true] %s3174
          %3180 = dma.vmem_to_hbm [thread:$0]  %s3175, 4096, %s3173, %s3161, 128, 128, 8
        $region64: #{tpu_custom_call.1} parent=39 // pred_fallthru
          _
      $region40: #{tpu_custom_call.1} parent=5 // pred_fallthru
        _
      %p3181 = scmp.le.s32.totalorder 2, %s19
      // Predicated region
      $region65: #{tpu_custom_call.1} parent=5 // pred_check
        %p3182 = pneg %p3181
      $region66: #{tpu_custom_call.1} parent=5 // pred_check_branch
        %3184 = sbr.rel (%p3182) target = $region68
      $region67: #{tpu_custom_call.1} parent=5 // pred_region
        %s3185 = ssub.s32 %s19, 2
        // Predicated region
        $region69: #{tpu_custom_call.1} parent=67 // pred_check
          %p3186 = pneg %p158
        $region70: #{tpu_custom_call.1} parent=67 // pred_check_branch
          %3188 = sbr.rel (%p3186) target = $region72
        $region71: #{tpu_custom_call.1} parent=67 // pred_region
          %s3189 = sand.u32 %s143, 1
          %s3190 = scalar_lea.sflag [#allocation4], %s3189
          %s3191 = sand.u32 %s143, 1
          %s3192 = smul.addr %s3191, 256
          %s3193 = scalar_lea.vmem [#allocation11], %s3192
          %3194 = dma.done %s3190, 4096
        $region72: #{tpu_custom_call.1} parent=67 // pred_fallthru
          _
      $region68: #{tpu_custom_call.1} parent=5 // pred_fallthru
        _
    $region6: #{tpu_custom_call.1} parent=1 // loop_footer
      %s23 = sadd.s32 1, %s19
    $region7: #{tpu_custom_call.1} parent=1 // loop_footer_branch
      %18 = sbr.rel target = $region3
    $region8: #{tpu_custom_call.1} parent=1 // loop_exit
      _
    %3195 = vsyncpa [#allocation3], 1
    %s3196 = scalar_lea.sflag [#allocation3], 1
    %3197 = vsyncpa %s3196, 1
    %3198 = vsyncpa [#allocation6], 1
    %3199 = vsyncpa [#allocation9], 1
    %3200 = vsyncpa [#allocation4], 1
    %s3201 = scalar_lea.sflag [#allocation4], 1
    %3202 = vsyncpa %s3201, 1

</llo_original>
